<compile_context>
chip_gen: v7x
topology: tpu7x:2x2x1
jax: 0.10.0
libtpu: 0.0.40
codegen_flags: <defaults>
</compile_context>

<pallas_src>
import functools
import math

import numpy as np
import jax
import jax.numpy as jnp
from jax import lax
from jax.experimental import pallas as pl
from jax.experimental.pallas import tpu as pltpu

# ---- model dimensions (match the PyTorch __init__ defaults) ---------------------
GLO_FEATURES = 16
POINT_FEATURES = 16
FEATURE_SIZE = GLO_FEATURES + POINT_FEATURES        # 32
HIDDEN = 64
NUM_GLO_EMBEDDINGS = 8
COLOR_CHANNELS = 3
SH_DIM = 16                                         # SphericalHarmonics degree 4
MONO_DIM = 24                                       # direction monomial lanes (8-aligned)
OUT_WIDTH = 8                                       # slimmed kernel output width (>= channels)

_MIN_GRID_STEPS = 4                                 # feed both v7x TCs / bound tail padding


def _round_up(x: int, m: int) -> int:
    return (x + m - 1) // m * m


# ---------------------------------------------------------------------------------
# SH-degree-4 -> monomial folding (done once, in the wrapper)
# ---------------------------------------------------------------------------------
def _sh_to_monomial_transform() -> np.ndarray:
    """(MONO_DIM, SH_DIM) matrix T such that  sh = mono @ T + const_row.

    Monomial lane order produced by the kernel:
      0:x 1:y 2:z | 3:xx 4:yy 5:zz | 6:xz 7:xy 8:yz |
      9:x3 10:y3 11:z3 | 12:xxz 13:xyy 14:yzz | 15:xxy 16:yyz 17:xzz |
      18..20: xyz | 21..23: padding (zero rows, lane-alignment only)
    The constant (l=0) column and the zz-offset of sh[6] go into the h1 bias instead.
    """
    c1 = 0.48860251190291987
    c2a = 1.0925484305920792
    c2b = 0.94617469575755997
    c2c = 0.54627421529603959
    c3a = 0.59004358992664352
    c3b = 2.8906114426405538
    c3c = 0.45704579946446572
    c3d = 0.3731763325901154
    c3e = 1.4453057213202769
    entries = [
        (1, 1, -c1), (2, 2, 0.48860251190291992), (0, 3, -c1),        # degree 1
        (7, 4, c2a), (8, 5, -c2a), (5, 6, c2b), (6, 7, -c2a),         # degree 2
        (3, 8, c2c), (4, 8, -c2c),
        (15, 9, -3.0 * c3a), (10, 9, c3a),                            # degree 3
        (19, 10, c3b),
        (1, 11, c3c), (14, 11, -5.0 * c3c),
        (11, 12, 5.0 * c3d), (2, 12, -3.0 * c3d),
        (0, 13, c3c), (17, 13, -5.0 * c3c),
        (12, 14, c3e), (16, 14, -c3e),
        (9, 15, c3a), (13, 15, -3.0 * c3a),
    ]
    T = np.zeros((MONO_DIM, SH_DIM), np.float32)
    for r, c, v in entries:
        T[r, c] = v
    return T


def prepare_params(params):
    """Fold SH constants into the color-MLP first layer and pre-cast weights to bf16."""
    T = jnp.asarray(_sh_to_monomial_transform())
    cW1_sh = params["cW1_sh"].astype(jnp.float32)
    bf = lambda w: w.astype(jnp.bfloat16)
    return {
        "glo": params["glo"].astype(jnp.float32),
        "aW1": bf(params["aW1"]),
        "aW2": bf(params["aW2"]),
        "aW3": bf(params["aW3"]),
        "cW1_mono": bf(T @ cW1_sh),                                  # (24, 64)
        "cW1_f": bf(params["cW1_f"]),
        "cW2": bf(params["cW2"]),
        "cW3": bf(params["cW3"][:, :OUT_WIDTH]),                     # slimmed output head
        # constant SH column + zz offset, added to h1 after the matmul (f32, exact)
        "h1_bias": (0.28209479177387814 * cW1_sh[0:1, :]
                    - 0.31539156525251999 * cW1_sh[6:7, :]),
    }


# ---------------------------------------------------------------------------------
# Pallas kernel: one row-tile of points per grid step, all three matmul stacks fused
# ---------------------------------------------------------------------------------
def _color_kernel(pf_ref, pos_ref, cam_ref, glo_ref,
                  aw1, aw2, aw3,
                  cw1_mono, cw1_f, cw2, cw3, h1b_ref,
                  out_ref):
    tm = pf_ref.shape[0]

    # ----- feature = [point_features | glo], assembled directly in bf16 -----
    pf = pf_ref[...]                                                   # (tm, 16) bf16
    glo_b = jnp.broadcast_to(glo_ref[...], (tm, GLO_FEATURES))         # (tm, 16) bf16
    feat = jnp.concatenate([pf, glo_b], axis=1)                        # (tm, 32) bf16

    # ----- affine MLP: 32 -> 64 -> 64 -> (32 log_scale | 32 shift), bf16 MXU -----
    h = jnp.maximum(jnp.dot(feat, aw1[...], preferred_element_type=jnp.float32), 0.0)
    h = jnp.maximum(jnp.dot(h.astype(jnp.bfloat16), aw2[...],
                            preferred_element_type=jnp.float32), 0.0)
    affine = jnp.dot(h.astype(jnp.bfloat16), aw3[...],
                     preferred_element_type=jnp.float32)               # (tm, 64) f32
    log_scale = affine[:, :FEATURE_SIZE]
    shift = affine[:, FEATURE_SIZE:]
    f = jnp.exp(log_scale) * feat + shift                              # (tm, 32) f32

    # ----- normalized viewing direction (F.normalize, eps clamp), rsqrt on EUP -----
    d = pos_ref[...] - cam_ref[...]                                    # (tm, 3) f32
    ss = d[:, 0:1] * d[:, 0:1] + d[:, 1:2] * d[:, 1:2] + d[:, 2:3] * d[:, 2:3]
    inv = lax.rsqrt(jnp.maximum(ss, 1e-24))    # clamp also protects zero padded rows
    dn = d * inv                                                       # (tm, 3)

    # ----- direction monomials up to degree 3, band-wise on (tm,3) blocks -----
    # (SH coefficients / constants are already folded into cw1_mono / h1_bias.)
    r1 = jnp.concatenate([dn[:, 2:3], dn[:, 0:2]], axis=1)             # [z, x, y]
    r2 = jnp.concatenate([dn[:, 1:3], dn[:, 0:1]], axis=1)             # [y, z, x]
    m2a = dn * dn                                                      # [xx, yy, zz]
    m2b = dn * r1                                                      # [xz, xy, yz]
    m3a = m2a * dn                                                     # [x3, y3, z3]
    m3b = m2a * r1                                                     # [xxz, xyy, yzz]
    m3c = m2a * r2                                                     # [xxy, yyz, xzz]
    m3d = m2b * r2                                                     # [xyz, xyz, xyz]
    mono = jnp.concatenate([dn, m2a, m2b, m3a, m3b, m3c, m3d, dn],
                           axis=1)                                     # (tm, 24) f32
    # (trailing dn block only pads the contracting dim to 24; its weight rows are zero)

    # ----- color MLP: [mono | feature] -> 64 -> 64 -> OUT_WIDTH (sigmoid) -----
    h1 = (jnp.dot(mono.astype(jnp.bfloat16), cw1_mono[...],
                  preferred_element_type=jnp.float32)
          + jnp.dot(f.astype(jnp.bfloat16), cw1_f[...],
                    preferred_element_type=jnp.float32)
          + h1b_ref[...])                                              # (tm, 64) f32
    h1 = jnp.maximum(h1, 0.0)
    h2 = jnp.maximum(jnp.dot(h1.astype(jnp.bfloat16), cw2[...],
                             preferred_element_type=jnp.float32), 0.0)
    logits = jnp.dot(h2.astype(jnp.bfloat16), cw3[...],
                     preferred_element_type=jnp.float32)               # (tm, 8)
    out_ref[...] = jax.nn.sigmoid(logits)


# ---------------------------------------------------------------------------------
# Wrapper (glue: glo lookup, tile choice, padding, pallas_call, output slicing)
# ---------------------------------------------------------------------------------
@functools.partial(jax.jit, static_argnames=("tm",))
def color_model_forward(prepped, point_features, positions, cam_pos, cam_idx, tm=1024):
    assert tm % 8 == 0
    N = positions.shape[0]
    # Aim for >= _MIN_GRID_STEPS grid steps (v7x has 2 TCs; also bounds tail padding),
    # capped at tm rows per step.
    tm_eff = max(8, min(tm, _round_up(-(-N // _MIN_GRID_STEPS), 8)))
    N_pad = _round_up(N, tm_eff)

    # TODO(synk): point_features is downcast to bf16 (halves its HBM traffic); this is an
    #             input-precision change relative to the f32 reference forward.
    pf = point_features.astype(jnp.bfloat16)
    pos = positions.astype(jnp.float32)
    if N_pad != N:
        pf = jnp.pad(pf, ((0, N_pad - N), (0, 0)))
        pos = jnp.pad(pos, ((0, N_pad - N), (0, 0)))

    glo = lax.dynamic_slice_in_dim(prepped["glo"], cam_idx, 1, axis=0)  # (1,16), traced idx
    glo = glo.astype(jnp.bfloat16)
    cam = cam_pos.reshape(1, 3).astype(jnp.float32)

    const = lambda i: (0, 0)                                            # weights: resident block
    out = pl.pallas_call(
        _color_kernel,
        out_shape=jax.ShapeDtypeStruct((N_pad, OUT_WIDTH), jnp.float32),
        grid_spec=pltpu.PrefetchScalarGridSpec(
            num_scalar_prefetch=0,
            grid=(N_pad // tm_eff,),
            in_specs=[
                pl.BlockSpec((tm_eff, POINT_FEATURES), lambda i: (i, 0)),   # point features
                pl.BlockSpec((tm_eff, 3), lambda i: (i, 0)),                # positions
                pl.BlockSpec((1, 3), const),                                # cam_pos
                pl.BlockSpec((1, GLO_FEATURES), const),                     # glo row
                pl.BlockSpec((FEATURE_SIZE, HIDDEN), const),                # affine W1
                pl.BlockSpec((HIDDEN, HIDDEN), const),                      # affine W2
                pl.BlockSpec((HIDDEN, 2 * FEATURE_SIZE), const),            # affine W3
                pl.BlockSpec((MONO_DIM, HIDDEN), const),                    # color W1 (folded SH)
                pl.BlockSpec((FEATURE_SIZE, HIDDEN), const),                # color W1 (feature)
                pl.BlockSpec((HIDDEN, HIDDEN), const),                      # color W2
                pl.BlockSpec((HIDDEN, OUT_WIDTH), const),                   # color W3 (slim)
                pl.BlockSpec((1, HIDDEN), const),                           # h1 bias
            ],
            out_specs=pl.BlockSpec((tm_eff, OUT_WIDTH), lambda i: (i, 0)),
        ),
        compiler_params=pltpu.CompilerParams(
            dimension_semantics=("parallel",),
            vmem_limit_bytes=48 * 1024 * 1024,   # safe on v5e/v6e (128 MiB) and v7x (64 MiB)
        ),
    )(pf, pos, cam, glo,
      prepped["aW1"], prepped["aW2"], prepped["aW3"],
      prepped["cW1_mono"], prepped["cW1_f"], prepped["cW2"], prepped["cW3"],
      prepped["h1_bias"])

    # Consumers that can accept the (N_pad, OUT_WIDTH) block should take it directly;
    # this small slice only keeps the module's (N, 3) float32 contract.
    return out[:N, :COLOR_CHANNELS]


# ---------------------------------------------------------------------------------
# Deterministic parameter initialization (synthetic; mirrors __init__ shapes)
# ---------------------------------------------------------------------------------
def init_params(key):
    ks = jax.random.split(key, 8)

    def xavier(k, shape):
        limit = math.sqrt(6.0 / (shape[0] + shape[1]))
        return jax.random.uniform(k, shape, jnp.float32, -limit, limit)

    return {
        # nn.Parameter(torch.zeros(num_glo_embeddings, glo_features)); init.normal_(std=0.5)
        "glo": 0.5 * jax.random.normal(ks[0], (NUM_GLO_EMBEDDINGS, GLO_FEATURES), jnp.float32),
        # affine MLP (32 -> 64 -> 64 -> 64); output later chunked into (log_scale, shift)
        "aW1": xavier(ks[1], (FEATURE_SIZE, HIDDEN)),
        "aW2": xavier(ks[2], (HIDDEN, HIDDEN)),
        "aW3": xavier(ks[3], (HIDDEN, 2 * FEATURE_SIZE)),
        # color MLP (48 -> 64 -> 64 -> 16), first layer split into SH / feature rows
        "cW1_sh": xavier(ks[4], (SH_DIM, HIDDEN)),
        "cW1_f": xavier(ks[5], (FEATURE_SIZE, HIDDEN)),
        "cW2": xavier(ks[6], (HIDDEN, HIDDEN)),
        "cW3": xavier(ks[7], (HIDDEN, 16)),
    }


# ---------------------------------------------------------------------------------
# Pure-JAX f32 reference of the same forward pass (for a sanity check)
# ---------------------------------------------------------------------------------
def reference_forward(params, point_features, positions, cam_pos, cam_idx):
    N = positions.shape[0]
    glo = jnp.broadcast_to(params["glo"][cam_idx][None, :], (N, GLO_FEATURES))
    feat = jnp.concatenate([point_features.astype(jnp.float32), glo], axis=1)

    h = jax.nn.relu(feat @ params["aW1"])
    h = jax.nn.relu(h @ params["aW2"])
    affine = h @ params["aW3"]
    log_scale, shift = affine[:, :FEATURE_SIZE], affine[:, FEATURE_SIZE:]
    feat = jnp.exp(log_scale) * feat + shift

    d = positions.astype(jnp.float32) - cam_pos[None, :].astype(jnp.float32)
    d = d / jnp.maximum(jnp.linalg.norm(d, axis=1, keepdims=True), 1e-12)
    x, y, z = d[:, 0:1], d[:, 1:2], d[:, 2:3]
    xx, yy, zz, xy, yz, xz = x * x, y * y, z * z, x * y, y * z, x * z
    ones = jnp.ones_like(x)
    sh = jnp.concatenate([
        0.28209479177387814 * ones, -0.48860251190291987 * y,
        0.48860251190291992 * z, -0.48860251190291987 * x,
        1.0925484305920792 * xy, -1.0925484305920792 * yz,
        0.94617469575755997 * zz - 0.31539156525251999, -1.0925484305920792 * xz,
        0.54627421529603959 * (xx - yy), 0.59004358992664352 * y * (-3.0 * xx + yy),
        2.8906114426405538 * xy * z, 0.45704579946446572 * y * (1.0 - 5.0 * zz),
        0.3731763325901154 * z * (5.0 * zz - 3.0), 0.45704579946446572 * x * (1.0 - 5.0 * zz),
        1.4453057213202769 * z * (xx - yy), 0.59004358992664352 * x * (xx - 3.0 * yy),
    ], axis=1)

    inp = jnp.concatenate([sh, feat], axis=1)                          # (N, 48)
    w1 = jnp.concatenate([params["cW1_sh"], params["cW1_f"]], axis=0)  # (48, 64)
    h = jax.nn.relu(inp @ w1)
    h = jax.nn.relu(h @ params["cW2"])
    out = jax.nn.sigmoid(h @ params["cW3"])
    return out[:, :COLOR_CHANNELS]


if __name__ == "__main__":
    key = jax.random.PRNGKey(0)
    kp, kpf, kpos, kcam = jax.random.split(key, 4)

    N = 256
    params = init_params(kp)
    prepped = prepare_params(params)            # fold SH constants + cast weights once
    point_features = 0.3 * jax.random.normal(kpf, (N, POINT_FEATURES), jnp.float32)
    positions = jax.random.normal(kpos, (N, 3), jnp.float32) * 2.0
    cam_pos = jax.random.normal(kcam, (3,), jnp.float32)
    cam_idx = 1

    out = color_model_forward(prepped, point_features, positions, cam_pos, cam_idx)
    out = jax.block_until_ready(out)

    ref = reference_forward(params, point_features, positions, cam_pos, cam_idx)

    assert out.shape == (N, COLOR_CHANNELS), out.shape
    assert out.dtype == jnp.float32
    assert bool(jnp.all(jnp.isfinite(out)))
    # bf16 MXU operands / bf16 point features vs f32 reference: well within this tolerance
    assert bool(jnp.allclose(out, ref, atol=2e-2, rtol=2e-2)), (
        float(jnp.max(jnp.abs(out - ref))))

    print("KERNEL_OK")
</pallas_src>

<mosaic_0001>
module attributes {stable_mosaic.version = 11 : i64} {
  func.func @_color_kernel(%arg0: i32, %arg1: memref<64x16xbf16, #tpu.memory_space<vmem>>, %arg2: memref<64x3xf32, #tpu.memory_space<vmem>>, %arg3: memref<1x3xf32, #tpu.memory_space<vmem>>, %arg4: memref<1x16xbf16, #tpu.memory_space<vmem>>, %arg5: memref<32x64xbf16, #tpu.memory_space<vmem>>, %arg6: memref<64x64xbf16, #tpu.memory_space<vmem>>, %arg7: memref<64x64xbf16, #tpu.memory_space<vmem>>, %arg8: memref<24x64xbf16, #tpu.memory_space<vmem>>, %arg9: memref<32x64xbf16, #tpu.memory_space<vmem>>, %arg10: memref<64x64xbf16, #tpu.memory_space<vmem>>, %arg11: memref<64x8xbf16, #tpu.memory_space<vmem>>, %arg12: memref<1x64xf32, #tpu.memory_space<vmem>>, %arg13: memref<64x8xf32, #tpu.memory_space<vmem>>) attributes {dimension_semantics = [#tpu.dimension_semantics<parallel>], iteration_bounds = array<i64: 4>, scalar_prefetch = 0 : i64, scratch_operands = 0 : i64, tpu.core_type = #tpu.core_type<tc>, window_params = [{transform_indices = @transform_0, window_bounds = array<i64: 64, 16>}, {transform_indices = @transform_1, window_bounds = array<i64: 64, 3>}, {pipeline_mode = #tpu.pipeline_mode<synchronous>, transform_indices = @transform_2, window_bounds = array<i64: 1, 3>}, {pipeline_mode = #tpu.pipeline_mode<synchronous>, transform_indices = @transform_3, window_bounds = array<i64: 1, 16>}, {pipeline_mode = #tpu.pipeline_mode<synchronous>, transform_indices = @transform_4, window_bounds = array<i64: 32, 64>}, {pipeline_mode = #tpu.pipeline_mode<synchronous>, transform_indices = @transform_5, window_bounds = array<i64: 64, 64>}, {pipeline_mode = #tpu.pipeline_mode<synchronous>, transform_indices = @transform_6, window_bounds = array<i64: 64, 64>}, {pipeline_mode = #tpu.pipeline_mode<synchronous>, transform_indices = @transform_7, window_bounds = array<i64: 24, 64>}, {pipeline_mode = #tpu.pipeline_mode<synchronous>, transform_indices = @transform_8, window_bounds = array<i64: 32, 64>}, {pipeline_mode = #tpu.pipeline_mode<synchronous>, transform_indices = @transform_9, window_bounds = array<i64: 64, 64>}, {pipeline_mode = #tpu.pipeline_mode<synchronous>, transform_indices = @transform_10, window_bounds = array<i64: 64, 8>}, {pipeline_mode = #tpu.pipeline_mode<synchronous>, transform_indices = @transform_11, window_bounds = array<i64: 1, 64>}, {transform_indices = @transform_12, window_bounds = array<i64: 64, 8>}]} {
    %c0 = arith.constant 0 : index
    %c0_0 = arith.constant 0 : index
    %0 = vector.load %arg1[%c0, %c0_0] : memref<64x16xbf16, #tpu.memory_space<vmem>>, vector<64x16xbf16>
    %c0_1 = arith.constant 0 : index
    %c0_2 = arith.constant 0 : index
    %1 = vector.load %arg4[%c0_1, %c0_2] : memref<1x16xbf16, #tpu.memory_space<vmem>>, vector<1x16xbf16>
    %2 = vector.shape_cast %1 : vector<1x16xbf16> to vector<1x16xbf16>
    %3 = vector.broadcast %2 : vector<1x16xbf16> to vector<64x16xbf16>
    %4 = tpu.concatenate %0, %3 in 1 : vector<64x16xbf16>, vector<64x16xbf16> -> vector<64x32xbf16>
    %c0_3 = arith.constant 0 : index
    %c0_4 = arith.constant 0 : index
    %5 = vector.load %arg5[%c0_3, %c0_4] : memref<32x64xbf16, #tpu.memory_space<vmem>>, vector<32x64xbf16>
    %cst = arith.constant dense<0.000000e+00> : vector<64x64xf32>
    %6 = tpu.matmul %4, %5, %cst {dimension_numbers = #tpu.dot_dimension_numbers<[1], [0], [0], [1], [0, 0, 1, 1], [], []>} : vector<64x32xbf16>, vector<32x64xbf16>, vector<64x64xf32> -> vector<64x64xf32>
    %cst_5 = arith.constant 0.000000e+00 : f32
    %7 = vector.broadcast %cst_5 : f32 to vector<64x64xf32>
    %8 = arith.maximumf %6, %7 : vector<64x64xf32>
    %9 = arith.truncf %8 : vector<64x64xf32> to vector<64x64xbf16>
    %c0_6 = arith.constant 0 : index
    %c0_7 = arith.constant 0 : index
    %10 = vector.load %arg6[%c0_6, %c0_7] : memref<64x64xbf16, #tpu.memory_space<vmem>>, vector<64x64xbf16>
    %cst_8 = arith.constant dense<0.000000e+00> : vector<64x64xf32>
    %11 = tpu.matmul %9, %10, %cst_8 {dimension_numbers = #tpu.dot_dimension_numbers<[1], [0], [0], [1], [0, 0, 1, 1], [], []>} : vector<64x64xbf16>, vector<64x64xbf16>, vector<64x64xf32> -> vector<64x64xf32>
    %cst_9 = arith.constant 0.000000e+00 : f32
    %12 = vector.broadcast %cst_9 : f32 to vector<64x64xf32>
    %13 = arith.maximumf %11, %12 : vector<64x64xf32>
    %14 = arith.truncf %13 : vector<64x64xf32> to vector<64x64xbf16>
    %c0_10 = arith.constant 0 : index
    %c0_11 = arith.constant 0 : index
    %15 = vector.load %arg7[%c0_10, %c0_11] : memref<64x64xbf16, #tpu.memory_space<vmem>>, vector<64x64xbf16>
    %cst_12 = arith.constant dense<0.000000e+00> : vector<64x64xf32>
    %16 = tpu.matmul %14, %15, %cst_12 {dimension_numbers = #tpu.dot_dimension_numbers<[1], [0], [0], [1], [0, 0, 1, 1], [], []>} : vector<64x64xbf16>, vector<64x64xbf16>, vector<64x64xf32> -> vector<64x64xf32>
    %17 = vector.extract_strided_slice %16 {offsets = [0, 0], sizes = [64, 32], strides = [1, 1]} : vector<64x64xf32> to vector<64x32xf32>
    %18 = vector.extract_strided_slice %16 {offsets = [0, 32], sizes = [64, 32], strides = [1, 1]} : vector<64x64xf32> to vector<64x32xf32>
    %19 = math.exp %17 : vector<64x32xf32>
    %20 = arith.extf %4 : vector<64x32xbf16> to vector<64x32xf32>
    %21 = arith.mulf %19, %20 : vector<64x32xf32>
    %22 = arith.addf %21, %18 : vector<64x32xf32>
    %c0_13 = arith.constant 0 : index
    %c0_14 = arith.constant 0 : index
    %23 = vector.load %arg2[%c0_13, %c0_14] : memref<64x3xf32, #tpu.memory_space<vmem>>, vector<64x3xf32>
    %c0_15 = arith.constant 0 : index
    %c0_16 = arith.constant 0 : index
    %24 = vector.load %arg3[%c0_15, %c0_16] : memref<1x3xf32, #tpu.memory_space<vmem>>, vector<1x3xf32>
    %25 = vector.broadcast %24 : vector<1x3xf32> to vector<64x3xf32>
    %26 = arith.subf %23, %25 : vector<64x3xf32>
    %27 = vector.extract_strided_slice %26 {offsets = [0, 0], sizes = [64, 1], strides = [1, 1]} : vector<64x3xf32> to vector<64x1xf32>
    %28 = vector.extract_strided_slice %26 {offsets = [0, 0], sizes = [64, 1], strides = [1, 1]} : vector<64x3xf32> to vector<64x1xf32>
    %29 = arith.mulf %27, %28 : vector<64x1xf32>
    %30 = vector.extract_strided_slice %26 {offsets = [0, 1], sizes = [64, 1], strides = [1, 1]} : vector<64x3xf32> to vector<64x1xf32>
    %31 = vector.extract_strided_slice %26 {offsets = [0, 1], sizes = [64, 1], strides = [1, 1]} : vector<64x3xf32> to vector<64x1xf32>
    %32 = arith.mulf %30, %31 : vector<64x1xf32>
    %33 = arith.addf %29, %32 : vector<64x1xf32>
    %34 = vector.extract_strided_slice %26 {offsets = [0, 2], sizes = [64, 1], strides = [1, 1]} : vector<64x3xf32> to vector<64x1xf32>
    %35 = vector.extract_strided_slice %26 {offsets = [0, 2], sizes = [64, 1], strides = [1, 1]} : vector<64x3xf32> to vector<64x1xf32>
    %36 = arith.mulf %34, %35 : vector<64x1xf32>
    %37 = arith.addf %33, %36 : vector<64x1xf32>
    %cst_17 = arith.constant 1.000000e-24 : f32
    %38 = vector.broadcast %cst_17 : f32 to vector<64x1xf32>
    %39 = arith.maximumf %37, %38 : vector<64x1xf32>
    %40 = math.rsqrt %39 : vector<64x1xf32>
    %41 = vector.broadcast %40 : vector<64x1xf32> to vector<64x3xf32>
    %42 = arith.mulf %26, %41 : vector<64x3xf32>
    %43 = vector.extract_strided_slice %42 {offsets = [0, 2], sizes = [64, 1], strides = [1, 1]} : vector<64x3xf32> to vector<64x1xf32>
    %44 = vector.extract_strided_slice %42 {offsets = [0, 0], sizes = [64, 2], strides = [1, 1]} : vector<64x3xf32> to vector<64x2xf32>
    %45 = tpu.concatenate %43, %44 in 1 : vector<64x1xf32>, vector<64x2xf32> -> vector<64x3xf32>
    %46 = vector.extract_strided_slice %42 {offsets = [0, 1], sizes = [64, 2], strides = [1, 1]} : vector<64x3xf32> to vector<64x2xf32>
    %47 = vector.extract_strided_slice %42 {offsets = [0, 0], sizes = [64, 1], strides = [1, 1]} : vector<64x3xf32> to vector<64x1xf32>
    %48 = tpu.concatenate %46, %47 in 1 : vector<64x2xf32>, vector<64x1xf32> -> vector<64x3xf32>
    %49 = arith.mulf %42, %42 : vector<64x3xf32>
    %50 = arith.mulf %42, %45 : vector<64x3xf32>
    %51 = arith.mulf %49, %42 : vector<64x3xf32>
    %52 = arith.mulf %49, %45 : vector<64x3xf32>
    %53 = arith.mulf %49, %48 : vector<64x3xf32>
    %54 = arith.mulf %50, %48 : vector<64x3xf32>
    %55 = tpu.concatenate %42, %49, %50, %51, %52, %53, %54, %42 in 1 : vector<64x3xf32>, vector<64x3xf32>, vector<64x3xf32>, vector<64x3xf32>, vector<64x3xf32>, vector<64x3xf32>, vector<64x3xf32>, vector<64x3xf32> -> vector<64x24xf32>
    %56 = arith.truncf %55 : vector<64x24xf32> to vector<64x24xbf16>
    %c0_18 = arith.constant 0 : index
    %c0_19 = arith.constant 0 : index
    %57 = vector.load %arg8[%c0_18, %c0_19] : memref<24x64xbf16, #tpu.memory_space<vmem>>, vector<24x64xbf16>
    %cst_20 = arith.constant dense<0.000000e+00> : vector<64x64xf32>
    %58 = tpu.matmul %56, %57, %cst_20 {dimension_numbers = #tpu.dot_dimension_numbers<[1], [0], [0], [1], [0, 0, 1, 1], [], []>} : vector<64x24xbf16>, vector<24x64xbf16>, vector<64x64xf32> -> vector<64x64xf32>
    %59 = arith.truncf %22 : vector<64x32xf32> to vector<64x32xbf16>
    %c0_21 = arith.constant 0 : index
    %c0_22 = arith.constant 0 : index
    %60 = vector.load %arg9[%c0_21, %c0_22] : memref<32x64xbf16, #tpu.memory_space<vmem>>, vector<32x64xbf16>
    %cst_23 = arith.constant dense<0.000000e+00> : vector<64x64xf32>
    %61 = tpu.matmul %59, %60, %cst_23 {dimension_numbers = #tpu.dot_dimension_numbers<[1], [0], [0], [1], [0, 0, 1, 1], [], []>} : vector<64x32xbf16>, vector<32x64xbf16>, vector<64x64xf32> -> vector<64x64xf32>
    %62 = arith.addf %58, %61 : vector<64x64xf32>
    %c0_24 = arith.constant 0 : index
    %c0_25 = arith.constant 0 : index
    %63 = vector.load %arg12[%c0_24, %c0_25] : memref<1x64xf32, #tpu.memory_space<vmem>>, vector<1x64xf32>
    %64 = vector.broadcast %63 : vector<1x64xf32> to vector<64x64xf32>
    %65 = arith.addf %62, %64 : vector<64x64xf32>
    %cst_26 = arith.constant 0.000000e+00 : f32
    %66 = vector.broadcast %cst_26 : f32 to vector<64x64xf32>
    %67 = arith.maximumf %65, %66 : vector<64x64xf32>
    %68 = arith.truncf %67 : vector<64x64xf32> to vector<64x64xbf16>
    %c0_27 = arith.constant 0 : index
    %c0_28 = arith.constant 0 : index
    %69 = vector.load %arg10[%c0_27, %c0_28] : memref<64x64xbf16, #tpu.memory_space<vmem>>, vector<64x64xbf16>
    %cst_29 = arith.constant dense<0.000000e+00> : vector<64x64xf32>
    %70 = tpu.matmul %68, %69, %cst_29 {dimension_numbers = #tpu.dot_dimension_numbers<[1], [0], [0], [1], [0, 0, 1, 1], [], []>} : vector<64x64xbf16>, vector<64x64xbf16>, vector<64x64xf32> -> vector<64x64xf32>
    %cst_30 = arith.constant 0.000000e+00 : f32
    %71 = vector.broadcast %cst_30 : f32 to vector<64x64xf32>
    %72 = arith.maximumf %70, %71 : vector<64x64xf32>
    %73 = arith.truncf %72 : vector<64x64xf32> to vector<64x64xbf16>
    %c0_31 = arith.constant 0 : index
    %c0_32 = arith.constant 0 : index
    %74 = vector.load %arg11[%c0_31, %c0_32] : memref<64x8xbf16, #tpu.memory_space<vmem>>, vector<64x8xbf16>
    %cst_33 = arith.constant dense<0.000000e+00> : vector<64x8xf32>
    %75 = tpu.matmul %73, %74, %cst_33 {dimension_numbers = #tpu.dot_dimension_numbers<[1], [0], [0], [1], [0, 0, 1, 1], [], []>} : vector<64x64xbf16>, vector<64x8xbf16>, vector<64x8xf32> -> vector<64x8xf32>
    %76 = arith.negf %75 : vector<64x8xf32>
    %77 = math.exp %76 : vector<64x8xf32>
    %cst_34 = arith.constant 1.000000e+00 : f32
    %78 = vector.broadcast %cst_34 : f32 to vector<64x8xf32>
    %79 = arith.addf %78, %77 : vector<64x8xf32>
    %80 = arith.divf %78, %79 : vector<64x8xf32>
    %c0_35 = arith.constant 0 : index
    %c0_36 = arith.constant 0 : index
    %81 = vector.load %arg13[%c0_35, %c0_36] : memref<64x8xf32, #tpu.memory_space<vmem>>, vector<64x8xf32>
    tpu.vector_store %arg13[%c0_35, %c0_36], %80 {strides = array<i32>} : memref<64x8xf32, #tpu.memory_space<vmem>>, vector<64x8xf32>,
    return
  }
  func.func @transform_0(%arg0: i32) -> (i32, i32) {
    %c0_i32 = arith.constant 0 : i32
    %c0_i32_0 = arith.constant 0 : i32
    return %arg0, %c0_i32 : i32, i32
  }
  func.func @transform_1(%arg0: i32) -> (i32, i32) {
    %c0_i32 = arith.constant 0 : i32
    %c0_i32_0 = arith.constant 0 : i32
    return %arg0, %c0_i32 : i32, i32
  }
  func.func @transform_2(%arg0: i32) -> (i32, i32) {
    %c0_i32 = arith.constant 0 : i32
    %c0_i32_0 = arith.constant 0 : i32
    %c0_i32_1 = arith.constant 0 : i32
    return %c0_i32, %c0_i32_0 : i32, i32
  }
  func.func @transform_3(%arg0: i32) -> (i32, i32) {
    %c0_i32 = arith.constant 0 : i32
    %c0_i32_0 = arith.constant 0 : i32
    %c0_i32_1 = arith.constant 0 : i32
    return %c0_i32, %c0_i32_0 : i32, i32
  }
  func.func @transform_4(%arg0: i32) -> (i32, i32) {
    %c0_i32 = arith.constant 0 : i32
    %c0_i32_0 = arith.constant 0 : i32
    %c0_i32_1 = arith.constant 0 : i32
    return %c0_i32, %c0_i32_0 : i32, i32
  }
  func.func @transform_5(%arg0: i32) -> (i32, i32) {
    %c0_i32 = arith.constant 0 : i32
    %c0_i32_0 = arith.constant 0 : i32
    %c0_i32_1 = arith.constant 0 : i32
    return %c0_i32, %c0_i32_0 : i32, i32
  }
  func.func @transform_6(%arg0: i32) -> (i32, i32) {
    %c0_i32 = arith.constant 0 : i32
    %c0_i32_0 = arith.constant 0 : i32
    %c0_i32_1 = arith.constant 0 : i32
    return %c0_i32, %c0_i32_0 : i32, i32
  }
  func.func @transform_7(%arg0: i32) -> (i32, i32) {
    %c0_i32 = arith.constant 0 : i32
    %c0_i32_0 = arith.constant 0 : i32
    %c0_i32_1 = arith.constant 0 : i32
    return %c0_i32, %c0_i32_0 : i32, i32
  }
  func.func @transform_8(%arg0: i32) -> (i32, i32) {
    %c0_i32 = arith.constant 0 : i32
    %c0_i32_0 = arith.constant 0 : i32
    %c0_i32_1 = arith.constant 0 : i32
    return %c0_i32, %c0_i32_0 : i32, i32
  }
  func.func @transform_9(%arg0: i32) -> (i32, i32) {
    %c0_i32 = arith.constant 0 : i32
    %c0_i32_0 = arith.constant 0 : i32
    %c0_i32_1 = arith.constant 0 : i32
    return %c0_i32, %c0_i32_0 : i32, i32
  }
  func.func @transform_10(%arg0: i32) -> (i32, i32) {
    %c0_i32 = arith.constant 0 : i32
    %c0_i32_0 = arith.constant 0 : i32
    %c0_i32_1 = arith.constant 0 : i32
    return %c0_i32, %c0_i32_0 : i32, i32
  }
  func.func @transform_11(%arg0: i32) -> (i32, i32) {
    %c0_i32 = arith.constant 0 : i32
    %c0_i32_0 = arith.constant 0 : i32
    %c0_i32_1 = arith.constant 0 : i32
    return %c0_i32, %c0_i32_0 : i32, i32
  }
  func.func @transform_12(%arg0: i32) -> (i32, i32) {
    %c0_i32 = arith.constant 0 : i32
    %c0_i32_0 = arith.constant 0 : i32
    return %arg0, %c0_i32 : i32, i32
  }
}

</mosaic_0001>

<llo_original>
// kernel: color_model_forward.1
$region0: #{color_model_forward.1}
  #allocation0 [shape = 'u32[]', space=smem, size = 0x4, offset = 0x4, fixed_abs, tag = 'smem constant byte address 0x4 - core index']
  #allocation1 [shape = 'u32[144,128]{1,0:T(1,128)}', space=vmem, size = 0x12000, scoped, tag = 'internal scratch']
  %s0 = inlined_call_operand.vmem [shape: bf16[256,16], index: 0, kind: input, shape index: {}]
  %s1 = inlined_call_operand.vmem [shape: f32[256,3], index: 1, kind: input, shape index: {}]
  %s2 = inlined_call_operand.vmem [shape: f32[1,3], index: 2, kind: input, shape index: {}]
  %s3 = inlined_call_operand.vmem [shape: bf16[1,16], index: 3, kind: input, shape index: {}]
  %s4 = inlined_call_operand.vmem [shape: bf16[32,64], index: 4, kind: input, shape index: {}]
  %s5 = inlined_call_operand.vmem [shape: bf16[64,64], index: 5, kind: input, shape index: {}]
  %s6 = inlined_call_operand.vmem [shape: bf16[64,64], index: 6, kind: input, shape index: {}]
  %s7 = inlined_call_operand.vmem [shape: bf16[24,64], index: 7, kind: input, shape index: {}]
  %s8 = inlined_call_operand.vmem [shape: bf16[32,64], index: 8, kind: input, shape index: {}]
  %s9 = inlined_call_operand.vmem [shape: bf16[64,64], index: 9, kind: input, shape index: {}]
  %s10 = inlined_call_operand.vmem [shape: bf16[64,8], index: 10, kind: input, shape index: {}]
  %s11 = inlined_call_operand.vmem [shape: f32[1,64], index: 11, kind: input, shape index: {}]
  %s12 = inlined_call_operand.vmem [shape: f32[256,8], index: 12, kind: output, shape index: {}]
  %s13 = sld [smem:[#allocation0]]
  $region81: #{color_model_forward.1} parent=0
    _
  %s15 = ssub.s32 1, %s13
  %s16 = scalar_select 0, %s15, %s13
  loop: start=0, step=1, limit=6
  $region2: #{color_model_forward.1} parent=0 // loop_pre_header
    _
  $region3: #{color_model_forward.1} parent=0 // loop_header
    %s18 = sphi 0, %s22
    %p19 = scmp.ge.s32.totalorder %s18, 6
    %s28 = sphi 0, %s30
    %s31 = sphi 0, %s28
    %s32 = sphi 0, %s31
    %s48 = sphi 0, %s32
    %s54 = sphi 0, %s56
    %s57 = sphi 0, %s54
    %s58 = sphi 0, %s57
    %s74 = sphi 0, %s58
    %s78 = sphi 0, %s78
    %s80 = sphi 0, %s78
    %s81 = sphi 0, %s80
    %s95 = sphi 0, %s81
    %s99 = sphi 0, %s99
    %s101 = sphi 0, %s99
    %s102 = sphi 0, %s101
    %s116 = sphi 0, %s102
    %s120 = sphi 0, %s120
    %s122 = sphi 0, %s120
    %s123 = sphi 0, %s122
    %s137 = sphi 0, %s123
    %s141 = sphi 0, %s141
    %s143 = sphi 0, %s141
    %s144 = sphi 0, %s143
    %s158 = sphi 0, %s144
    %s162 = sphi 0, %s162
    %s164 = sphi 0, %s162
    %s165 = sphi 0, %s164
    %s179 = sphi 0, %s165
    %s183 = sphi 0, %s183
    %s185 = sphi 0, %s183
    %s186 = sphi 0, %s185
    %s200 = sphi 0, %s186
    %s204 = sphi 0, %s204
    %s206 = sphi 0, %s204
    %s207 = sphi 0, %s206
    %s221 = sphi 0, %s207
    %s225 = sphi 0, %s225
    %s227 = sphi 0, %s225
    %s228 = sphi 0, %s227
    %s242 = sphi 0, %s228
    %s246 = sphi 0, %s246
    %s248 = sphi 0, %s246
    %s249 = sphi 0, %s248
    %s263 = sphi 0, %s249
    %s267 = sphi 0, %s267
    %s269 = sphi 0, %s267
    %s270 = sphi 0, %s269
    %s284 = sphi 0, %s270
    %s290 = sphi 0, %s292
    %s293 = sphi 0, %s290
    %s294 = sphi 0, %s293
    %s310 = sphi 0, %s294
  $region4: #{color_model_forward.1} parent=0 // loop_header_branch
    %21 = sbr.rel (%p19) target = $region8
  $region5: #{color_model_forward.1} parent=0 // loop_body
    %s23 = ssub.s32 %s18, 1
    %s24 = ssub.s32 %s18, 2
    %s25 = sadd.s32 %s18, 1
    %s26 = ssub.s32 %s18, %s25
    %p27 = scmp.eq.s32.totalorder %s26, 0
    %s29 = sadd.s32 %s28, 1
    %s30 = scalar_select %p27, %s28, %s29
    %p33 = pneg %p27
    %p34 = scmp.eq.s32.totalorder %s18, 3
    %p35 = por %p33, %p34
    %p36 = scmp.ne.s32.totalorder %s28, %s31
    %p37 = scmp.eq.s32.totalorder %s18, 0
    %p38 = por %p36, %p37
    %p39 = scmp.ne.s32.totalorder %s28, %s31
    %p40 = scmp.eq.s32.totalorder %s23, 3
    %p41 = por %p39, %p40
    %p42 = scmp.ne.s32.totalorder %s31, %s32
    %p43 = scmp.eq.s32.totalorder %s23, 0
    %p44 = por %p42, %p43
    %p45 = scmp.ne.s32.totalorder %s31, %s32
    %p46 = scmp.eq.s32.totalorder %s24, 3
    %p47 = por %p45, %p46
    %p49 = scmp.ne.s32.totalorder %s32, %s48
    %p50 = scmp.eq.s32.totalorder %s24, 0
    %p51 = por %p49, %p50
    %s52 = ssub.s32 %s18, %s25
    %p53 = scmp.eq.s32.totalorder %s52, 0
    %s55 = sadd.s32 %s54, 1
    %s56 = scalar_select %p53, %s54, %s55
    %p59 = pneg %p53
    %p60 = scmp.eq.s32.totalorder %s18, 3
    %p61 = por %p59, %p60
    %p62 = scmp.ne.s32.totalorder %s54, %s57
    %p63 = scmp.eq.s32.totalorder %s18, 0
    %p64 = por %p62, %p63
    %p65 = scmp.ne.s32.totalorder %s54, %s57
    %p66 = scmp.eq.s32.totalorder %s23, 3
    %p67 = por %p65, %p66
    %p68 = scmp.ne.s32.totalorder %s57, %s58
    %p69 = scmp.eq.s32.totalorder %s23, 0
    %p70 = por %p68, %p69
    %p71 = scmp.ne.s32.totalorder %s57, %s58
    %p72 = scmp.eq.s32.totalorder %s24, 3
    %p73 = por %p71, %p72
    %p75 = scmp.ne.s32.totalorder %s58, %s74
    %p76 = scmp.eq.s32.totalorder %s24, 0
    %p77 = por %p75, %p76
    %s79 = sadd.s32 %s78, 1
    %p82 = scmp.eq.s32.totalorder %s18, 3
    %p83 = scmp.ne.s32.totalorder %s78, %s80
    %p84 = scmp.eq.s32.totalorder %s18, 0
    %p85 = por %p83, %p84
    %p86 = scmp.ne.s32.totalorder %s78, %s80
    %p87 = scmp.eq.s32.totalorder %s23, 3
    %p88 = por %p86, %p87
    %p89 = scmp.ne.s32.totalorder %s80, %s81
    %p90 = scmp.eq.s32.totalorder %s23, 0
    %p91 = por %p89, %p90
    %p92 = scmp.ne.s32.totalorder %s80, %s81
    %p93 = scmp.eq.s32.totalorder %s24, 3
    %p94 = por %p92, %p93
    %p96 = scmp.ne.s32.totalorder %s81, %s95
    %p97 = scmp.eq.s32.totalorder %s24, 0
    %p98 = por %p96, %p97
    %s100 = sadd.s32 %s99, 1
    %p103 = scmp.eq.s32.totalorder %s18, 3
    %p104 = scmp.ne.s32.totalorder %s99, %s101
    %p105 = scmp.eq.s32.totalorder %s18, 0
    %p106 = por %p104, %p105
    %p107 = scmp.ne.s32.totalorder %s99, %s101
    %p108 = scmp.eq.s32.totalorder %s23, 3
    %p109 = por %p107, %p108
    %p110 = scmp.ne.s32.totalorder %s101, %s102
    %p111 = scmp.eq.s32.totalorder %s23, 0
    %p112 = por %p110, %p111
    %p113 = scmp.ne.s32.totalorder %s101, %s102
    %p114 = scmp.eq.s32.totalorder %s24, 3
    %p115 = por %p113, %p114
    %p117 = scmp.ne.s32.totalorder %s102, %s116
    %p118 = scmp.eq.s32.totalorder %s24, 0
    %p119 = por %p117, %p118
    %s121 = sadd.s32 %s120, 1
    %p124 = scmp.eq.s32.totalorder %s18, 3
    %p125 = scmp.ne.s32.totalorder %s120, %s122
    %p126 = scmp.eq.s32.totalorder %s18, 0
    %p127 = por %p125, %p126
    %p128 = scmp.ne.s32.totalorder %s120, %s122
    %p129 = scmp.eq.s32.totalorder %s23, 3
    %p130 = por %p128, %p129
    %p131 = scmp.ne.s32.totalorder %s122, %s123
    %p132 = scmp.eq.s32.totalorder %s23, 0
    %p133 = por %p131, %p132
    %p134 = scmp.ne.s32.totalorder %s122, %s123
    %p135 = scmp.eq.s32.totalorder %s24, 3
    %p136 = por %p134, %p135
    %p138 = scmp.ne.s32.totalorder %s123, %s137
    %p139 = scmp.eq.s32.totalorder %s24, 0
    %p140 = por %p138, %p139
    %s142 = sadd.s32 %s141, 1
    %p145 = scmp.eq.s32.totalorder %s18, 3
    %p146 = scmp.ne.s32.totalorder %s141, %s143
    %p147 = scmp.eq.s32.totalorder %s18, 0
    %p148 = por %p146, %p147
    %p149 = scmp.ne.s32.totalorder %s141, %s143
    %p150 = scmp.eq.s32.totalorder %s23, 3
    %p151 = por %p149, %p150
    %p152 = scmp.ne.s32.totalorder %s143, %s144
    %p153 = scmp.eq.s32.totalorder %s23, 0
    %p154 = por %p152, %p153
    %p155 = scmp.ne.s32.totalorder %s143, %s144
    %p156 = scmp.eq.s32.totalorder %s24, 3
    %p157 = por %p155, %p156
    %p159 = scmp.ne.s32.totalorder %s144, %s158
    %p160 = scmp.eq.s32.totalorder %s24, 0
    %p161 = por %p159, %p160
    %s163 = sadd.s32 %s162, 1
    %p166 = scmp.eq.s32.totalorder %s18, 3
    %p167 = scmp.ne.s32.totalorder %s162, %s164
    %p168 = scmp.eq.s32.totalorder %s18, 0
    %p169 = por %p167, %p168
    %p170 = scmp.ne.s32.totalorder %s162, %s164
    %p171 = scmp.eq.s32.totalorder %s23, 3
    %p172 = por %p170, %p171
    %p173 = scmp.ne.s32.totalorder %s164, %s165
    %p174 = scmp.eq.s32.totalorder %s23, 0
    %p175 = por %p173, %p174
    %p176 = scmp.ne.s32.totalorder %s164, %s165
    %p177 = scmp.eq.s32.totalorder %s24, 3
    %p178 = por %p176, %p177
    %p180 = scmp.ne.s32.totalorder %s165, %s179
    %p181 = scmp.eq.s32.totalorder %s24, 0
    %p182 = por %p180, %p181
    %s184 = sadd.s32 %s183, 1
    %p187 = scmp.eq.s32.totalorder %s18, 3
    %p188 = scmp.ne.s32.totalorder %s183, %s185
    %p189 = scmp.eq.s32.totalorder %s18, 0
    %p190 = por %p188, %p189
    %p191 = scmp.ne.s32.totalorder %s183, %s185
    %p192 = scmp.eq.s32.totalorder %s23, 3
    %p193 = por %p191, %p192
    %p194 = scmp.ne.s32.totalorder %s185, %s186
    %p195 = scmp.eq.s32.totalorder %s23, 0
    %p196 = por %p194, %p195
    %p197 = scmp.ne.s32.totalorder %s185, %s186
    %p198 = scmp.eq.s32.totalorder %s24, 3
    %p199 = por %p197, %p198
    %p201 = scmp.ne.s32.totalorder %s186, %s200
    %p202 = scmp.eq.s32.totalorder %s24, 0
    %p203 = por %p201, %p202
    %s205 = sadd.s32 %s204, 1
    %p208 = scmp.eq.s32.totalorder %s18, 3
    %p209 = scmp.ne.s32.totalorder %s204, %s206
    %p210 = scmp.eq.s32.totalorder %s18, 0
    %p211 = por %p209, %p210
    %p212 = scmp.ne.s32.totalorder %s204, %s206
    %p213 = scmp.eq.s32.totalorder %s23, 3
    %p214 = por %p212, %p213
    %p215 = scmp.ne.s32.totalorder %s206, %s207
    %p216 = scmp.eq.s32.totalorder %s23, 0
    %p217 = por %p215, %p216
    %p218 = scmp.ne.s32.totalorder %s206, %s207
    %p219 = scmp.eq.s32.totalorder %s24, 3
    %p220 = por %p218, %p219
    %p222 = scmp.ne.s32.totalorder %s207, %s221
    %p223 = scmp.eq.s32.totalorder %s24, 0
    %p224 = por %p222, %p223
    %s226 = sadd.s32 %s225, 1
    %p229 = scmp.eq.s32.totalorder %s18, 3
    %p230 = scmp.ne.s32.totalorder %s225, %s227
    %p231 = scmp.eq.s32.totalorder %s18, 0
    %p232 = por %p230, %p231
    %p233 = scmp.ne.s32.totalorder %s225, %s227
    %p234 = scmp.eq.s32.totalorder %s23, 3
    %p235 = por %p233, %p234
    %p236 = scmp.ne.s32.totalorder %s227, %s228
    %p237 = scmp.eq.s32.totalorder %s23, 0
    %p238 = por %p236, %p237
    %p239 = scmp.ne.s32.totalorder %s227, %s228
    %p240 = scmp.eq.s32.totalorder %s24, 3
    %p241 = por %p239, %p240
    %p243 = scmp.ne.s32.totalorder %s228, %s242
    %p244 = scmp.eq.s32.totalorder %s24, 0
    %p245 = por %p243, %p244
    %s247 = sadd.s32 %s246, 1
    %p250 = scmp.eq.s32.totalorder %s18, 3
    %p251 = scmp.ne.s32.totalorder %s246, %s248
    %p252 = scmp.eq.s32.totalorder %s18, 0
    %p253 = por %p251, %p252
    %p254 = scmp.ne.s32.totalorder %s246, %s248
    %p255 = scmp.eq.s32.totalorder %s23, 3
    %p256 = por %p254, %p255
    %p257 = scmp.ne.s32.totalorder %s248, %s249
    %p258 = scmp.eq.s32.totalorder %s23, 0
    %p259 = por %p257, %p258
    %p260 = scmp.ne.s32.totalorder %s248, %s249
    %p261 = scmp.eq.s32.totalorder %s24, 3
    %p262 = por %p260, %p261
    %p264 = scmp.ne.s32.totalorder %s249, %s263
    %p265 = scmp.eq.s32.totalorder %s24, 0
    %p266 = por %p264, %p265
    %s268 = sadd.s32 %s267, 1
    %p271 = scmp.eq.s32.totalorder %s18, 3
    %p272 = scmp.ne.s32.totalorder %s267, %s269
    %p273 = scmp.eq.s32.totalorder %s18, 0
    %p274 = por %p272, %p273
    %p275 = scmp.ne.s32.totalorder %s267, %s269
    %p276 = scmp.eq.s32.totalorder %s23, 3
    %p277 = por %p275, %p276
    %p278 = scmp.ne.s32.totalorder %s269, %s270
    %p279 = scmp.eq.s32.totalorder %s23, 0
    %p280 = por %p278, %p279
    %p281 = scmp.ne.s32.totalorder %s269, %s270
    %p282 = scmp.eq.s32.totalorder %s24, 3
    %p283 = por %p281, %p282
    %p285 = scmp.ne.s32.totalorder %s270, %s284
    %p286 = scmp.eq.s32.totalorder %s24, 0
    %p287 = por %p285, %p286
    %s288 = ssub.s32 %s18, %s25
    %p289 = scmp.eq.s32.totalorder %s288, 0
    %s291 = sadd.s32 %s290, 1
    %s292 = scalar_select %p289, %s290, %s291
    %p295 = pneg %p289
    %p296 = scmp.eq.s32.totalorder %s18, 3
    %p297 = por %p295, %p296
    %p298 = scmp.ne.s32.totalorder %s290, %s293
    %p299 = scmp.eq.s32.totalorder %s18, 0
    %p300 = por %p298, %p299
    %p301 = scmp.ne.s32.totalorder %s290, %s293
    %p302 = scmp.eq.s32.totalorder %s23, 3
    %p303 = por %p301, %p302
    %p304 = scmp.ne.s32.totalorder %s293, %s294
    %p305 = scmp.eq.s32.totalorder %s23, 0
    %p306 = por %p304, %p305
    %p307 = scmp.ne.s32.totalorder %s293, %s294
    %p308 = scmp.eq.s32.totalorder %s24, 3
    %p309 = por %p307, %p308
    %p311 = scmp.ne.s32.totalorder %s294, %s310
    %p312 = scmp.eq.s32.totalorder %s24, 0
    %p313 = por %p311, %p312
    %p314 = scmp.le.s32.totalorder 1, %s18
    %p315 = scmp.lt.s32.totalorder %s18, 5
    %p316 = pnand %p314, %p315
    %p317 = pneg %p316
    // Predicated region
    $region9: #{color_model_forward.1} parent=5 // pred_check
      _
    $region10: #{color_model_forward.1} parent=5 // pred_check_branch
      %319 = sbr.rel (%p316) target = $region12
    $region11: #{color_model_forward.1} parent=5 // pred_region
      %s320 = ssub.s32 %s18, 1
      // Predicated region
      $region13: #{color_model_forward.1} parent=11 // pred_check
        %p321 = pneg %p91
      $region14: #{color_model_forward.1} parent=11 // pred_check_branch
        %323 = sbr.rel (%p321) target = $region16
      $region15: #{color_model_forward.1} parent=11 // pred_region
        _
      $region16: #{color_model_forward.1} parent=11 // pred_fallthru
        _
      // Predicated region
      $region17: #{color_model_forward.1} parent=11 // pred_check
        %p324 = pneg %p112
      $region18: #{color_model_forward.1} parent=11 // pred_check_branch
        %326 = sbr.rel (%p324) target = $region20
      $region19: #{color_model_forward.1} parent=11 // pred_region
        _
      $region20: #{color_model_forward.1} parent=11 // pred_fallthru
        _
      // Predicated region
      $region21: #{color_model_forward.1} parent=11 // pred_check
        %p327 = pneg %p133
      $region22: #{color_model_forward.1} parent=11 // pred_check_branch
        %329 = sbr.rel (%p327) target = $region24
      $region23: #{color_model_forward.1} parent=11 // pred_region
        _
      $region24: #{color_model_forward.1} parent=11 // pred_fallthru
        _
      // Predicated region
      $region25: #{color_model_forward.1} parent=11 // pred_check
        %p330 = pneg %p154
      $region26: #{color_model_forward.1} parent=11 // pred_check_branch
        %332 = sbr.rel (%p330) target = $region28
      $region27: #{color_model_forward.1} parent=11 // pred_region
        _
      $region28: #{color_model_forward.1} parent=11 // pred_fallthru
        _
      // Predicated region
      $region29: #{color_model_forward.1} parent=11 // pred_check
        %p333 = pneg %p175
      $region30: #{color_model_forward.1} parent=11 // pred_check_branch
        %335 = sbr.rel (%p333) target = $region32
      $region31: #{color_model_forward.1} parent=11 // pred_region
        _
      $region32: #{color_model_forward.1} parent=11 // pred_fallthru
        _
      // Predicated region
      $region33: #{color_model_forward.1} parent=11 // pred_check
        %p336 = pneg %p196
      $region34: #{color_model_forward.1} parent=11 // pred_check_branch
        %338 = sbr.rel (%p336) target = $region36
      $region35: #{color_model_forward.1} parent=11 // pred_region
        _
      $region36: #{color_model_forward.1} parent=11 // pred_fallthru
        _
      // Predicated region
      $region37: #{color_model_forward.1} parent=11 // pred_check
        %p339 = pneg %p217
      $region38: #{color_model_forward.1} parent=11 // pred_check_branch
        %341 = sbr.rel (%p339) target = $region40
      $region39: #{color_model_forward.1} parent=11 // pred_region
        _
      $region40: #{color_model_forward.1} parent=11 // pred_fallthru
        _
      // Predicated region
      $region41: #{color_model_forward.1} parent=11 // pred_check
        %p342 = pneg %p238
      $region42: #{color_model_forward.1} parent=11 // pred_check_branch
        %344 = sbr.rel (%p342) target = $region44
      $region43: #{color_model_forward.1} parent=11 // pred_region
        _
      $region44: #{color_model_forward.1} parent=11 // pred_fallthru
        _
      // Predicated region
      $region45: #{color_model_forward.1} parent=11 // pred_check
        %p345 = pneg %p259
      $region46: #{color_model_forward.1} parent=11 // pred_check_branch
        %347 = sbr.rel (%p345) target = $region48
      $region47: #{color_model_forward.1} parent=11 // pred_region
        _
      $region48: #{color_model_forward.1} parent=11 // pred_fallthru
        _
      // Predicated region
      $region49: #{color_model_forward.1} parent=11 // pred_check
        %p348 = pneg %p280
      $region50: #{color_model_forward.1} parent=11 // pred_check_branch
        %350 = sbr.rel (%p348) target = $region52
      $region51: #{color_model_forward.1} parent=11 // pred_region
        _
      $region52: #{color_model_forward.1} parent=11 // pred_fallthru
        _
    $region12: #{color_model_forward.1} parent=5 // pred_fallthru
      _
    %p351 = scmp.lt.s32.totalorder %s18, 4
    // Predicated region
    $region53: #{color_model_forward.1} parent=5 // pred_check
      %p352 = pneg %p351
    $region54: #{color_model_forward.1} parent=5 // pred_check_branch
      %354 = sbr.rel (%p352) target = $region56
    $region55: #{color_model_forward.1} parent=5 // pred_region
      // Predicated region
      $region57: #{color_model_forward.1} parent=55 // pred_check
        %p355 = pneg %p38
      $region58: #{color_model_forward.1} parent=55 // pred_check_branch
        %357 = sbr.rel (%p355) target = $region60
      $region59: #{color_model_forward.1} parent=55 // pred_region
        %s358 = smul.u32 8, %s18
        %p359 = scmp.lt.s32.totalorder %s358, 31
        %s360 = scalar_select %p359, %s358, 31
        %s361 = smul.addr %s360, 4
        %s362 = scalar_lea.vmem %s0, %s361
        %s363 = smul.u32 8, %s18
      $region60: #{color_model_forward.1} parent=55 // pred_fallthru
        _
      // Predicated region
      $region61: #{color_model_forward.1} parent=55 // pred_check
        %p364 = pneg %p64
      $region62: #{color_model_forward.1} parent=55 // pred_check_branch
        %366 = sbr.rel (%p364) target = $region64
      $region63: #{color_model_forward.1} parent=55 // pred_region
        %s367 = smul.u32 8, %s18
        %p368 = scmp.lt.s32.totalorder %s367, 31
        %s369 = scalar_select %p368, %s367, 31
        %s370 = smul.addr %s369, 8
        %s371 = scalar_lea.vmem %s1, %s370
        %s372 = smul.u32 8, %s18
      $region64: #{color_model_forward.1} parent=55 // pred_fallthru
        _
    $region56: #{color_model_forward.1} parent=5 // pred_fallthru
      _
    %p373 = scmp.le.s32.totalorder 1, %s18
    %p374 = scmp.lt.s32.totalorder %s18, 5
    %p375 = pnand %p373, %p374
    %p376 = pneg %p375
    // Predicated region
    $region65: #{color_model_forward.1} parent=5 // pred_check
      _
    $region66: #{color_model_forward.1} parent=5 // pred_check_branch
      %378 = sbr.rel (%p375) target = $region68
    $region67: #{color_model_forward.1} parent=5 // pred_region
      %s379 = ssub.s32 %s18, 1
      %s380 = smul.u32 8, %s23
      %p381 = scmp.lt.s32.totalorder %s380, 31
      %s382 = scalar_select %p381, %s380, 31
      %s383 = smul.addr %s382, 4
      %s384 = scalar_lea.vmem %s0, %s383
      %p385 = pneg %p44
      %p386 = pneg %p41
      %s387 = smul.u32 8, %s23
      %p388 = scmp.lt.s32.totalorder %s387, 31
      %s389 = scalar_select %p388, %s387, 31
      %s390 = smul.addr %s389, 8
      %s391 = scalar_lea.vmem %s1, %s390
      %p392 = pneg %p70
      %p393 = pneg %p67
      %p394 = pneg %p91
      %p395 = pneg %p88
      %p396 = pneg %p112
      %p397 = pneg %p109
      %p398 = pneg %p133
      %p399 = pneg %p130
      %p400 = pneg %p154
      %p401 = pneg %p151
      %p402 = pneg %p175
      %p403 = pneg %p172
      %p404 = pneg %p196
      %p405 = pneg %p193
      %p406 = pneg %p217
      %p407 = pneg %p214
      %p408 = pneg %p238
      %p409 = pneg %p235
      %p410 = pneg %p259
      %p411 = pneg %p256
      %p412 = pneg %p280
      %p413 = pneg %p277
      %p414 = pneg %p306
      %p415 = pneg %p303
      %s416 = smul.u32 8, %s23
      %p417 = scmp.lt.s32.totalorder %s416, 31
      %s418 = scalar_select %p417, %s416, 31
      %s419 = smul.addr %s418, 8
      %s420 = scalar_lea.vmem %s12, %s419
      %s421 = smul.u32 8, %s23
      %p422 = scmp.lt.s32.totalorder %s421, 31
      %s423 = scalar_select %p422, %s421, 31
      %s424 = smul.addr %s423, 4
      %s425 = scalar_lea.vmem %s0, %s424
      %s426 = smul.u32 8, %s23
      %s427 = smul.u32 8, %s23
      %p428 = scmp.lt.s32.totalorder %s427, 31
      %s429 = scalar_select %p428, %s427, 31
      %s430 = smul.addr %s429, 8
      %s431 = scalar_lea.vmem %s1, %s430
      %s432 = smul.u32 8, %s23
      %s433 = smul.u32 8, %s23
      %p434 = scmp.lt.s32.totalorder %s433, 31
      %s435 = scalar_select %p434, %s433, 31
      %s436 = smul.addr %s435, 8
      %s437 = scalar_lea.vmem %s12, %s436
      %s438 = smul.u32 8, %s23
      %v440 = vld [vmem:[%s425] sm:$0xf]
      %v441 = vld [vmem:[%s425 + $0x4] sm:$0xf]
      %v442 = vld [vmem:[%s425 + $0x8] sm:$0xf]
      %v443 = vld [vmem:[%s425 + $0xc] sm:$0xf]
      %v444 = vld [vmem:[%s425 + $0x10] sm:$0xf]
      %v445 = vld [vmem:[%s425 + $0x14] sm:$0xf]
      %v446 = vld [vmem:[%s425 + $0x18] sm:$0xf]
      %v447 = vld [vmem:[%s425 + $0x1c] sm:$0xf]
      %v448 = vld [vmem:[%s3] sm:$0x1]
      %v450 = vpack.i.b16 %v448, %v448
      %v452 = vlaneseq
      %v453 = vshrl.u32 %v452, 7
      %v454 = vsub.s32 0, %v453
      %v455 = vrot.slane %v450, %v454
      %v464 = vunpack.c.l.b16 %v440
      %v465 = vunpack.c.l.b16 %v441
      %v466 = vunpack.c.l.b16 %v442
      %v467 = vunpack.c.l.b16 %v443
      %v468 = vunpack.c.l.b16 %v444
      %v469 = vunpack.c.l.b16 %v445
      %v470 = vunpack.c.l.b16 %v446
      %v471 = vunpack.c.l.b16 %v447
      %v472 = vpack.c.b16 %v465, %v464
      %v473 = vpack.c.b16 %v467, %v466
      %v474 = vpack.c.b16 %v469, %v468
      %v475 = vpack.c.b16 %v471, %v470
      %477 = vrot.lane.b32.xlu0 %v455, 16
      %v478 = vpop.permute.xlu0 %477
      %vm479 = vcmask 130048
      %v482 = vsel %vm479, %v472, %v478
      %v485 = vsel %vm479, %v473, %v478
      %v488 = vsel %vm479, %v474, %v478
      %v491 = vsel %vm479, %v475, %v478
      %v493 = vld [vmem:[%s4] sm:$0xf]
      %v494 = vld [vmem:[%s4 + $0x4] sm:$0xf]
      %v495 = vld [vmem:[%s4 + $0x8] sm:$0xf]
      %v496 = vld [vmem:[%s4 + $0xc] sm:$0xf]
      %v501 = vunpack.c.l.b16 %v493
      %v502 = vunpack.c.l.b16 %v494
      %v503 = vunpack.c.l.b16 %v495
      %v504 = vunpack.c.l.b16 %v496
      %v505 = vpack.c.b16 %v502, %v501
      %v506 = vpack.c.b16 %v504, %v503
      %vm509 = vcmask 261120
      %v510 = vsel %vm509, %v482, 0
      %v512 = vsel %vm509, %v485, 0
      %v514 = vsel %vm509, %v488, 0
      %v516 = vsel %vm509, %v491, 0
      %518 = vmatprep.subr.bf16.mxu0 0
      %519 = vmatpush1.bf16.msra.mxu0 %v505
      %520 = vmatprep.subr.bf16.mxu0 0
      %521 = vmatpush1.bf16.msra.mxu0 %v506
      %522 = vmatprep.subr.bf16.mxu0 0
      %523 = vmatpush1.bf16.msra.mxu0 0
      %524 = vmatprep.subr.bf16.mxu0 0
      %525 = vmatpush1.bf16.msra.mxu0 0
      %526 = vmatprep.subr.bf16.mxu0 0
      %527 = vmatpush1.bf16.msra.mxu0 0
      %528 = vmatprep.subr.bf16.mxu0 0
      %529 = vmatpush1.bf16.msra.mxu0 0
      %530 = vmatprep.subr.bf16.mxu0 0
      %531 = vmatpush1.bf16.msra.mxu0 0
      %532 = vmatprep.subr.bf16.mxu0 0
      %533 = vmatpush1.bf16.msra.mxu0 0
      %534 = vmatprep.subr.bf16.mxu0 0
      %535 = vmatpush1.bf16.msra.mxu0 0
      %536 = vmatprep.subr.bf16.mxu0 0
      %537 = vmatpush1.bf16.msra.mxu0 0
      %538 = vmatprep.subr.bf16.mxu0 0
      %539 = vmatpush1.bf16.msra.mxu0 0
      %540 = vmatprep.subr.bf16.mxu0 0
      %541 = vmatpush1.bf16.msra.mxu0 0
      %542 = vmatprep.subr.bf16.mxu0 0
      %543 = vmatpush1.bf16.msra.mxu0 0
      %544 = vmatprep.subr.bf16.mxu0 0
      %545 = vmatpush1.bf16.msra.mxu0 0
      %546 = vmatprep.subr.bf16.mxu0 0
      %547 = vmatpush1.bf16.msra.mxu0 0
      %548 = vmatprep.subr.bf16.mxu0 0
      %549 = vmatpush1.bf16.msra.mxu0 0
      %550 = vmatprep.mubr.bf16.mxu0 0
      %551 = vmatmul.mubr.bf16.gmra.mrb[0].mxu0 %v510
      %v552 = vpop.f32.mrb[0].mxu0
      %v553 = vadd.f32 0.0, %v552
      %v554 = vpop.f32.mrb[0].mxu0
      %v555 = vpop.f32.mrb[0].mxu0
      %v556 = vadd.f32 0.0, %v555
      %v557 = vpop.f32.mrb[0].mxu0
      %558 = vmatprep.mubr.bf16.mxu0 0
      %559 = vmatmul.mubr.bf16.gmra.mrb[0].mxu0 %v512
      %v560 = vpop.f32.mrb[0].mxu0
      %v561 = vadd.f32 0.0, %v560
      %v562 = vpop.f32.mrb[0].mxu0
      %v563 = vpop.f32.mrb[0].mxu0
      %v564 = vadd.f32 0.0, %v563
      %v565 = vpop.f32.mrb[0].mxu0
      %566 = vmatprep.mubr.bf16.mxu0 0
      %567 = vmatmul.mubr.bf16.gmra.mrb[0].mxu0 %v514
      %v568 = vpop.f32.mrb[0].mxu0
      %v569 = vadd.f32 0.0, %v568
      %v570 = vpop.f32.mrb[0].mxu0
      %v571 = vpop.f32.mrb[0].mxu0
      %v572 = vadd.f32 0.0, %v571
      %v573 = vpop.f32.mrb[0].mxu0
      %574 = vmatprep.mubr.bf16.mxu0 0
      %575 = vmatmul.mubr.bf16.gmra.mrb[0].mxu0 %v516
      %v576 = vpop.f32.mrb[0].mxu0
      %v577 = vadd.f32 0.0, %v576
      %v578 = vpop.f32.mrb[0].mxu0
      %v579 = vpop.f32.mrb[0].mxu0
      %v580 = vadd.f32 0.0, %v579
      %v581 = vpop.f32.mrb[0].mxu0
      %582 = vdwg.mxu0
      %v583 = vmax.f32 %v553, 0.0
      %v584 = vmax.f32 %v556, 0.0
      %v585 = vmax.f32 %v561, 0.0
      %v586 = vmax.f32 %v564, 0.0
      %v587 = vmax.f32 %v569, 0.0
      %v588 = vmax.f32 %v572, 0.0
      %v589 = vmax.f32 %v577, 0.0
      %v590 = vmax.f32 %v580, 0.0
      %v591 = vpack.c.bf16 %v584, %v583
      %v592 = vpack.c.bf16 %v586, %v585
      %v593 = vpack.c.bf16 %v588, %v587
      %v594 = vpack.c.bf16 %v590, %v589
      %v595 = vld [vmem:[%s5] sm:$0xf]
      %v596 = vld [vmem:[%s5 + $0x4] sm:$0xf]
      %v597 = vld [vmem:[%s5 + $0x8] sm:$0xf]
      %v598 = vld [vmem:[%s5 + $0xc] sm:$0xf]
      %v599 = vld [vmem:[%s5 + $0x10] sm:$0xf]
      %v600 = vld [vmem:[%s5 + $0x14] sm:$0xf]
      %v601 = vld [vmem:[%s5 + $0x18] sm:$0xf]
      %v602 = vld [vmem:[%s5 + $0x1c] sm:$0xf]
      %v611 = vunpack.c.l.b16 %v595
      %v612 = vunpack.c.l.b16 %v596
      %v613 = vunpack.c.l.b16 %v597
      %v614 = vunpack.c.l.b16 %v598
      %v615 = vunpack.c.l.b16 %v599
      %v616 = vunpack.c.l.b16 %v600
      %v617 = vunpack.c.l.b16 %v601
      %v618 = vunpack.c.l.b16 %v602
      %v619 = vpack.c.b16 %v612, %v611
      %v620 = vpack.c.b16 %v614, %v613
      %v621 = vpack.c.b16 %v616, %v615
      %v622 = vpack.c.b16 %v618, %v617
      %vm627 = vcmask 523264
      %v629 = vsel %vm627, %v591, 0
      %v632 = vsel %vm627, %v592, 0
      %v635 = vsel %vm627, %v593, 0
      %v638 = vsel %vm627, %v594, 0
      %640 = vmatprep.subr.bf16.mxu0 0
      %641 = vmatpush1.bf16.msra.mxu0 %v619
      %642 = vmatprep.subr.bf16.mxu0 0
      %643 = vmatpush1.bf16.msra.mxu0 %v620
      %644 = vmatprep.subr.bf16.mxu0 0
      %645 = vmatpush1.bf16.msra.mxu0 %v621
      %646 = vmatprep.subr.bf16.mxu0 0
      %647 = vmatpush1.bf16.msra.mxu0 %v622
      %648 = vmatprep.subr.bf16.mxu0 0
      %649 = vmatpush1.bf16.msra.mxu0 0
      %650 = vmatprep.subr.bf16.mxu0 0
      %651 = vmatpush1.bf16.msra.mxu0 0
      %652 = vmatprep.subr.bf16.mxu0 0
      %653 = vmatpush1.bf16.msra.mxu0 0
      %654 = vmatprep.subr.bf16.mxu0 0
      %655 = vmatpush1.bf16.msra.mxu0 0
      %656 = vmatprep.subr.bf16.mxu0 0
      %657 = vmatpush1.bf16.msra.mxu0 0
      %658 = vmatprep.subr.bf16.mxu0 0
      %659 = vmatpush1.bf16.msra.mxu0 0
      %660 = vmatprep.subr.bf16.mxu0 0
      %661 = vmatpush1.bf16.msra.mxu0 0
      %662 = vmatprep.subr.bf16.mxu0 0
      %663 = vmatpush1.bf16.msra.mxu0 0
      %664 = vmatprep.subr.bf16.mxu0 0
      %665 = vmatpush1.bf16.msra.mxu0 0
      %666 = vmatprep.subr.bf16.mxu0 0
      %667 = vmatpush1.bf16.msra.mxu0 0
      %668 = vmatprep.subr.bf16.mxu0 0
      %669 = vmatpush1.bf16.msra.mxu0 0
      %670 = vmatprep.subr.bf16.mxu0 0
      %671 = vmatpush1.bf16.msra.mxu0 0
      %672 = vmatprep.mubr.bf16.mxu0 0
      %673 = vmatmul.mubr.bf16.gmra.mrb[0].mxu0 %v629
      %v674 = vpop.f32.mrb[0].mxu0
      %v675 = vadd.f32 0.0, %v674
      %v676 = vpop.f32.mrb[0].mxu0
      %v677 = vpop.f32.mrb[0].mxu0
      %v678 = vadd.f32 0.0, %v677
      %v679 = vpop.f32.mrb[0].mxu0
      %680 = vmatprep.mubr.bf16.mxu0 0
      %681 = vmatmul.mubr.bf16.gmra.mrb[0].mxu0 %v632
      %v682 = vpop.f32.mrb[0].mxu0
      %v683 = vadd.f32 0.0, %v682
      %v684 = vpop.f32.mrb[0].mxu0
      %v685 = vpop.f32.mrb[0].mxu0
      %v686 = vadd.f32 0.0, %v685
      %v687 = vpop.f32.mrb[0].mxu0
      %688 = vmatprep.mubr.bf16.mxu0 0
      %689 = vmatmul.mubr.bf16.gmra.mrb[0].mxu0 %v635
      %v690 = vpop.f32.mrb[0].mxu0
      %v691 = vadd.f32 0.0, %v690
      %v692 = vpop.f32.mrb[0].mxu0
      %v693 = vpop.f32.mrb[0].mxu0
      %v694 = vadd.f32 0.0, %v693
      %v695 = vpop.f32.mrb[0].mxu0
      %696 = vmatprep.mubr.bf16.mxu0 0
      %697 = vmatmul.mubr.bf16.gmra.mrb[0].mxu0 %v638
      %v698 = vpop.f32.mrb[0].mxu0
      %v699 = vadd.f32 0.0, %v698
      %v700 = vpop.f32.mrb[0].mxu0
      %v701 = vpop.f32.mrb[0].mxu0
      %v702 = vadd.f32 0.0, %v701
      %v703 = vpop.f32.mrb[0].mxu0
      %704 = vdwg.mxu0
      %v705 = vmax.f32 %v675, 0.0
      %v706 = vmax.f32 %v678, 0.0
      %v707 = vmax.f32 %v683, 0.0
      %v708 = vmax.f32 %v686, 0.0
      %v709 = vmax.f32 %v691, 0.0
      %v710 = vmax.f32 %v694, 0.0
      %v711 = vmax.f32 %v699, 0.0
      %v712 = vmax.f32 %v702, 0.0
      %v713 = vpack.c.bf16 %v706, %v705
      %v714 = vpack.c.bf16 %v708, %v707
      %v715 = vpack.c.bf16 %v710, %v709
      %v716 = vpack.c.bf16 %v712, %v711
      %v717 = vld [vmem:[%s6] sm:$0xf]
      %v718 = vld [vmem:[%s6 + $0x4] sm:$0xf]
      %v719 = vld [vmem:[%s6 + $0x8] sm:$0xf]
      %v720 = vld [vmem:[%s6 + $0xc] sm:$0xf]
      %v721 = vld [vmem:[%s6 + $0x10] sm:$0xf]
      %v722 = vld [vmem:[%s6 + $0x14] sm:$0xf]
      %v723 = vld [vmem:[%s6 + $0x18] sm:$0xf]
      %v724 = vld [vmem:[%s6 + $0x1c] sm:$0xf]
      %v733 = vunpack.c.l.b16 %v717
      %v734 = vunpack.c.l.b16 %v718
      %v735 = vunpack.c.l.b16 %v719
      %v736 = vunpack.c.l.b16 %v720
      %v737 = vunpack.c.l.b16 %v721
      %v738 = vunpack.c.l.b16 %v722
      %v739 = vunpack.c.l.b16 %v723
      %v740 = vunpack.c.l.b16 %v724
      %v741 = vpack.c.b16 %v734, %v733
      %v742 = vpack.c.b16 %v736, %v735
      %v743 = vpack.c.b16 %v738, %v737
      %v744 = vpack.c.b16 %v740, %v739
      %v750 = vsel %vm627, %v713, 0
      %v753 = vsel %vm627, %v714, 0
      %v756 = vsel %vm627, %v715, 0
      %v759 = vsel %vm627, %v716, 0
      %761 = vmatprep.subr.bf16.mxu0 0
      %762 = vmatpush1.bf16.msra.mxu0 %v741
      %763 = vmatprep.subr.bf16.mxu0 0
      %764 = vmatpush1.bf16.msra.mxu0 %v742
      %765 = vmatprep.subr.bf16.mxu0 0
      %766 = vmatpush1.bf16.msra.mxu0 %v743
      %767 = vmatprep.subr.bf16.mxu0 0
      %768 = vmatpush1.bf16.msra.mxu0 %v744
      %769 = vmatprep.subr.bf16.mxu0 0
      %770 = vmatpush1.bf16.msra.mxu0 0
      %771 = vmatprep.subr.bf16.mxu0 0
      %772 = vmatpush1.bf16.msra.mxu0 0
      %773 = vmatprep.subr.bf16.mxu0 0
      %774 = vmatpush1.bf16.msra.mxu0 0
      %775 = vmatprep.subr.bf16.mxu0 0
      %776 = vmatpush1.bf16.msra.mxu0 0
      %777 = vmatprep.subr.bf16.mxu0 0
      %778 = vmatpush1.bf16.msra.mxu0 0
      %779 = vmatprep.subr.bf16.mxu0 0
      %780 = vmatpush1.bf16.msra.mxu0 0
      %781 = vmatprep.subr.bf16.mxu0 0
      %782 = vmatpush1.bf16.msra.mxu0 0
      %783 = vmatprep.subr.bf16.mxu0 0
      %784 = vmatpush1.bf16.msra.mxu0 0
      %785 = vmatprep.subr.bf16.mxu0 0
      %786 = vmatpush1.bf16.msra.mxu0 0
      %787 = vmatprep.subr.bf16.mxu0 0
      %788 = vmatpush1.bf16.msra.mxu0 0
      %789 = vmatprep.subr.bf16.mxu0 0
      %790 = vmatpush1.bf16.msra.mxu0 0
      %791 = vmatprep.subr.bf16.mxu0 0
      %792 = vmatpush1.bf16.msra.mxu0 0
      %793 = vmatprep.mubr.bf16.mxu0 0
      %794 = vmatmul.mubr.bf16.gmra.mrb[0].mxu0 %v750
      %v795 = vpop.f32.mrb[0].mxu0
      %v796 = vadd.f32 0.0, %v795
      %v797 = vpop.f32.mrb[0].mxu0
      %v798 = vpop.f32.mrb[0].mxu0
      %v799 = vadd.f32 0.0, %v798
      %v800 = vpop.f32.mrb[0].mxu0
      %801 = vmatprep.mubr.bf16.mxu0 0
      %802 = vmatmul.mubr.bf16.gmra.mrb[0].mxu0 %v753
      %v803 = vpop.f32.mrb[0].mxu0
      %v804 = vadd.f32 0.0, %v803
      %v805 = vpop.f32.mrb[0].mxu0
      %v806 = vpop.f32.mrb[0].mxu0
      %v807 = vadd.f32 0.0, %v806
      %v808 = vpop.f32.mrb[0].mxu0
      %809 = vmatprep.mubr.bf16.mxu0 0
      %810 = vmatmul.mubr.bf16.gmra.mrb[0].mxu0 %v756
      %v811 = vpop.f32.mrb[0].mxu0
      %v812 = vadd.f32 0.0, %v811
      %v813 = vpop.f32.mrb[0].mxu0
      %v814 = vpop.f32.mrb[0].mxu0
      %v815 = vadd.f32 0.0, %v814
      %v816 = vpop.f32.mrb[0].mxu0
      %817 = vmatprep.mubr.bf16.mxu0 0
      %818 = vmatmul.mubr.bf16.gmra.mrb[0].mxu0 %v759
      %v819 = vpop.f32.mrb[0].mxu0
      %v820 = vadd.f32 0.0, %v819
      %v821 = vpop.f32.mrb[0].mxu0
      %v822 = vpop.f32.mrb[0].mxu0
      %v823 = vadd.f32 0.0, %v822
      %v824 = vpop.f32.mrb[0].mxu0
      %825 = vdwg.mxu0
      %v826 = vmul.f32 %v796, 1.442695
      %v827 = vpow.pop %v826
      %v828 = vmul.f32 %v799, 1.442695
      %v829 = vpow.pop %v828
      %v830 = vmul.f32 %v804, 1.442695
      %v831 = vpow.pop %v830
      %v832 = vmul.f32 %v807, 1.442695
      %v833 = vpow.pop %v832
      %v834 = vmul.f32 %v812, 1.442695
      %v835 = vpow.pop %v834
      %v836 = vmul.f32 %v815, 1.442695
      %v837 = vpow.pop %v836
      %v838 = vmul.f32 %v820, 1.442695
      %v839 = vpow.pop %v838
      %v840 = vmul.f32 %v823, 1.442695
      %v841 = vpow.pop %v840
      %v842 = vunpack.c.l.bf16 %v482
      %v843 = vunpack.c.h.bf16 %v482
      %v844 = vunpack.c.l.bf16 %v485
      %v845 = vunpack.c.h.bf16 %v485
      %v846 = vunpack.c.l.bf16 %v488
      %v847 = vunpack.c.h.bf16 %v488
      %v848 = vunpack.c.l.bf16 %v491
      %v849 = vunpack.c.h.bf16 %v491
      %v850 = vmul.f32 %v827, %v842
      %v851 = vmul.f32 %v829, %v843
      %v852 = vmul.f32 %v831, %v844
      %v853 = vmul.f32 %v833, %v845
      %v854 = vmul.f32 %v835, %v846
      %v855 = vmul.f32 %v837, %v847
      %v856 = vmul.f32 %v839, %v848
      %v857 = vmul.f32 %v841, %v849
      %866 = vrot.lane.b32.xlu0 %v796, 96
      %v867 = vpop.permute.xlu0 %866
      %868 = vrot.lane.b32.xlu0 %v799, 96
      %v869 = vpop.permute.xlu0 %868
      %870 = vrot.lane.b32.xlu0 %v804, 96
      %v871 = vpop.permute.xlu0 %870
      %872 = vrot.lane.b32.xlu0 %v807, 96
      %v873 = vpop.permute.xlu0 %872
      %874 = vrot.lane.b32.xlu0 %v812, 96
      %v875 = vpop.permute.xlu0 %874
      %876 = vrot.lane.b32.xlu0 %v815, 96
      %v877 = vpop.permute.xlu0 %876
      %878 = vrot.lane.b32.xlu0 %v820, 96
      %v879 = vpop.permute.xlu0 %878
      %880 = vrot.lane.b32.xlu0 %v823, 96
      %v881 = vpop.permute.xlu0 %880
      %v890 = vadd.f32 %v850, %v867
      %v891 = vadd.f32 %v851, %v869
      %v892 = vadd.f32 %v852, %v871
      %v893 = vadd.f32 %v853, %v873
      %v894 = vadd.f32 %v854, %v875
      %v895 = vadd.f32 %v855, %v877
      %v896 = vadd.f32 %v856, %v879
      %v897 = vadd.f32 %v857, %v881
      %v898 = vld [vmem:[%s431] sm:$0xff]
      %v899 = vld [vmem:[%s431 + $0x8] sm:$0xff]
      %v900 = vld [vmem:[%s431 + $0x10] sm:$0xff]
      %v901 = vld [vmem:[%s431 + $0x18] sm:$0xff]
      %v902 = vld [vmem:[%s431 + $0x20] sm:$0xff]
      %v903 = vld [vmem:[%s431 + $0x28] sm:$0xff]
      %v904 = vld [vmem:[%s431 + $0x30] sm:$0xff]
      %v905 = vld [vmem:[%s431 + $0x38] sm:$0xff]
      %v906 = vld [vmem:[%s2] sm:$0x1]
      %v908 = vlaneseq
      %v909 = vshrl.u32 %v908, 7
      %v910 = vsub.s32 0, %v909
      %v911 = vrot.slane %v906, %v910
      %v913 = vsub.f32 %v898, %v911
      %v914 = vsub.f32 %v899, %v911
      %v915 = vsub.f32 %v900, %v911
      %v916 = vsub.f32 %v901, %v911
      %v917 = vsub.f32 %v902, %v911
      %v918 = vsub.f32 %v903, %v911
      %v919 = vsub.f32 %v904, %v911
      %v920 = vsub.f32 %v905, %v911
      %v921 = vmul.f32 %v913, %v913
      %v922 = vmul.f32 %v914, %v914
      %v923 = vmul.f32 %v915, %v915
      %v924 = vmul.f32 %v916, %v916
      %v925 = vmul.f32 %v917, %v917
      %v926 = vmul.f32 %v918, %v918
      %v927 = vmul.f32 %v919, %v919
      %v928 = vmul.f32 %v920, %v920
      %937 = vrot.lane.b32.xlu0 %v921, 127
      %v938 = vpop.permute.xlu0 %937
      %939 = vrot.lane.b32.xlu0 %v922, 127
      %v940 = vpop.permute.xlu0 %939
      %941 = vrot.lane.b32.xlu0 %v923, 127
      %v942 = vpop.permute.xlu0 %941
      %943 = vrot.lane.b32.xlu0 %v924, 127
      %v944 = vpop.permute.xlu0 %943
      %945 = vrot.lane.b32.xlu0 %v925, 127
      %v946 = vpop.permute.xlu0 %945
      %947 = vrot.lane.b32.xlu0 %v926, 127
      %v948 = vpop.permute.xlu0 %947
      %949 = vrot.lane.b32.xlu0 %v927, 127
      %v950 = vpop.permute.xlu0 %949
      %951 = vrot.lane.b32.xlu0 %v928, 127
      %v952 = vpop.permute.xlu0 %951
      %v961 = vadd.f32 %v921, %v938
      %v962 = vadd.f32 %v922, %v940
      %v963 = vadd.f32 %v923, %v942
      %v964 = vadd.f32 %v924, %v944
      %v965 = vadd.f32 %v925, %v946
      %v966 = vadd.f32 %v926, %v948
      %v967 = vadd.f32 %v927, %v950
      %v968 = vadd.f32 %v928, %v952
      %969 = vrot.lane.b32.xlu0 %v921, 126
      %v970 = vpop.permute.xlu0 %969
      %971 = vrot.lane.b32.xlu0 %v922, 126
      %v972 = vpop.permute.xlu0 %971
      %973 = vrot.lane.b32.xlu0 %v923, 126
      %v974 = vpop.permute.xlu0 %973
      %975 = vrot.lane.b32.xlu0 %v924, 126
      %v976 = vpop.permute.xlu0 %975
      %977 = vrot.lane.b32.xlu0 %v925, 126
      %v978 = vpop.permute.xlu0 %977
      %979 = vrot.lane.b32.xlu0 %v926, 126
      %v980 = vpop.permute.xlu0 %979
      %981 = vrot.lane.b32.xlu0 %v927, 126
      %v982 = vpop.permute.xlu0 %981
      %983 = vrot.lane.b32.xlu0 %v928, 126
      %v984 = vpop.permute.xlu0 %983
      %v993 = vadd.f32 %v961, %v970
      %v994 = vadd.f32 %v962, %v972
      %v995 = vadd.f32 %v963, %v974
      %v996 = vadd.f32 %v964, %v976
      %v997 = vadd.f32 %v965, %v978
      %v998 = vadd.f32 %v966, %v980
      %v999 = vadd.f32 %v967, %v982
      %v1000 = vadd.f32 %v968, %v984
      %v1001 = vmax.f32 %v993, 1e-24
      %v1002 = vmax.f32 %v994, 1e-24
      %v1003 = vmax.f32 %v995, 1e-24
      %v1004 = vmax.f32 %v996, 1e-24
      %v1005 = vmax.f32 %v997, 1e-24
      %v1006 = vmax.f32 %v998, 1e-24
      %v1007 = vmax.f32 %v999, 1e-24
      %v1008 = vmax.f32 %v1000, 1e-24
      %v1009 = vrsqrt.pop %v1001
      %v1010 = vrsqrt.pop %v1002
      %v1011 = vrsqrt.pop %v1003
      %v1012 = vrsqrt.pop %v1004
      %v1013 = vrsqrt.pop %v1005
      %v1014 = vrsqrt.pop %v1006
      %v1015 = vrsqrt.pop %v1007
      %v1016 = vrsqrt.pop %v1008
      %1018 = vset.pattern.permute.xlu0 0
      %1019 = vperm.xlu0 %1018, %v1009
      %v1020 = vpop.permute.xlu0 %1019
      %1023 = vset.pattern.permute.xlu0 0
      %1024 = vperm.xlu0 %1023, %v1010
      %v1025 = vpop.permute.xlu0 %1024
      %1028 = vset.pattern.permute.xlu0 0
      %1029 = vperm.xlu0 %1028, %v1011
      %v1030 = vpop.permute.xlu0 %1029
      %1033 = vset.pattern.permute.xlu0 0
      %1034 = vperm.xlu0 %1033, %v1012
      %v1035 = vpop.permute.xlu0 %1034
      %1038 = vset.pattern.permute.xlu0 0
      %1039 = vperm.xlu0 %1038, %v1013
      %v1040 = vpop.permute.xlu0 %1039
      %1043 = vset.pattern.permute.xlu0 0
      %1044 = vperm.xlu0 %1043, %v1014
      %v1045 = vpop.permute.xlu0 %1044
      %1048 = vset.pattern.permute.xlu0 0
      %1049 = vperm.xlu0 %1048, %v1015
      %v1050 = vpop.permute.xlu0 %1049
      %1053 = vset.pattern.permute.xlu0 0
      %1054 = vperm.xlu0 %1053, %v1016
      %v1055 = vpop.permute.xlu0 %1054
      %v1057 = vmul.f32 %v913, %v1020
      %v1058 = vmul.f32 %v914, %v1025
      %v1059 = vmul.f32 %v915, %v1030
      %v1060 = vmul.f32 %v916, %v1035
      %v1061 = vmul.f32 %v917, %v1040
      %v1062 = vmul.f32 %v918, %v1045
      %v1063 = vmul.f32 %v919, %v1050
      %v1064 = vmul.f32 %v920, %v1055
      %1073 = vrot.lane.b32.xlu0 %v1057, 126
      %v1074 = vpop.permute.xlu0 %1073
      %1075 = vrot.lane.b32.xlu0 %v1058, 126
      %v1076 = vpop.permute.xlu0 %1075
      %1077 = vrot.lane.b32.xlu0 %v1059, 126
      %v1078 = vpop.permute.xlu0 %1077
      %1079 = vrot.lane.b32.xlu0 %v1060, 126
      %v1080 = vpop.permute.xlu0 %1079
      %1081 = vrot.lane.b32.xlu0 %v1061, 126
      %v1082 = vpop.permute.xlu0 %1081
      %1083 = vrot.lane.b32.xlu0 %v1062, 126
      %v1084 = vpop.permute.xlu0 %1083
      %1085 = vrot.lane.b32.xlu0 %v1063, 126
      %v1086 = vpop.permute.xlu0 %1085
      %1087 = vrot.lane.b32.xlu0 %v1064, 126
      %v1088 = vpop.permute.xlu0 %1087
      %1097 = vrot.lane.b32.xlu0 %v1057, 1
      %v1098 = vpop.permute.xlu0 %1097
      %1099 = vrot.lane.b32.xlu0 %v1058, 1
      %v1100 = vpop.permute.xlu0 %1099
      %1101 = vrot.lane.b32.xlu0 %v1059, 1
      %v1102 = vpop.permute.xlu0 %1101
      %1103 = vrot.lane.b32.xlu0 %v1060, 1
      %v1104 = vpop.permute.xlu0 %1103
      %1105 = vrot.lane.b32.xlu0 %v1061, 1
      %v1106 = vpop.permute.xlu0 %1105
      %1107 = vrot.lane.b32.xlu0 %v1062, 1
      %v1108 = vpop.permute.xlu0 %1107
      %1109 = vrot.lane.b32.xlu0 %v1063, 1
      %v1110 = vpop.permute.xlu0 %1109
      %1111 = vrot.lane.b32.xlu0 %v1064, 1
      %v1112 = vpop.permute.xlu0 %1111
      %vm1121 = vcmask 7168
      %v1122 = vsel %vm1121, %v1074, %v1098
      %v1123 = vsel %vm1121, %v1076, %v1100
      %v1124 = vsel %vm1121, %v1078, %v1102
      %v1125 = vsel %vm1121, %v1080, %v1104
      %v1126 = vsel %vm1121, %v1082, %v1106
      %v1127 = vsel %vm1121, %v1084, %v1108
      %v1128 = vsel %vm1121, %v1086, %v1110
      %v1129 = vsel %vm1121, %v1088, %v1112
      %1130 = vrot.lane.b32.xlu0 %v1057, 127
      %v1131 = vpop.permute.xlu0 %1130
      %1132 = vrot.lane.b32.xlu0 %v1058, 127
      %v1133 = vpop.permute.xlu0 %1132
      %1134 = vrot.lane.b32.xlu0 %v1059, 127
      %v1135 = vpop.permute.xlu0 %1134
      %1136 = vrot.lane.b32.xlu0 %v1060, 127
      %v1137 = vpop.permute.xlu0 %1136
      %1138 = vrot.lane.b32.xlu0 %v1061, 127
      %v1139 = vpop.permute.xlu0 %1138
      %1140 = vrot.lane.b32.xlu0 %v1062, 127
      %v1141 = vpop.permute.xlu0 %1140
      %1142 = vrot.lane.b32.xlu0 %v1063, 127
      %v1143 = vpop.permute.xlu0 %1142
      %1144 = vrot.lane.b32.xlu0 %v1064, 127
      %v1145 = vpop.permute.xlu0 %1144
      %1154 = vrot.lane.b32.xlu0 %v1057, 2
      %v1155 = vpop.permute.xlu0 %1154
      %1156 = vrot.lane.b32.xlu0 %v1058, 2
      %v1157 = vpop.permute.xlu0 %1156
      %1158 = vrot.lane.b32.xlu0 %v1059, 2
      %v1159 = vpop.permute.xlu0 %1158
      %1160 = vrot.lane.b32.xlu0 %v1060, 2
      %v1161 = vpop.permute.xlu0 %1160
      %1162 = vrot.lane.b32.xlu0 %v1061, 2
      %v1163 = vpop.permute.xlu0 %1162
      %1164 = vrot.lane.b32.xlu0 %v1062, 2
      %v1165 = vpop.permute.xlu0 %1164
      %1166 = vrot.lane.b32.xlu0 %v1063, 2
      %v1167 = vpop.permute.xlu0 %1166
      %1168 = vrot.lane.b32.xlu0 %v1064, 2
      %v1169 = vpop.permute.xlu0 %1168
      %vm1178 = vcmask 15360
      %v1179 = vsel %vm1178, %v1131, %v1155
      %v1180 = vsel %vm1178, %v1133, %v1157
      %v1181 = vsel %vm1178, %v1135, %v1159
      %v1182 = vsel %vm1178, %v1137, %v1161
      %v1183 = vsel %vm1178, %v1139, %v1163
      %v1184 = vsel %vm1178, %v1141, %v1165
      %v1185 = vsel %vm1178, %v1143, %v1167
      %v1186 = vsel %vm1178, %v1145, %v1169
      %v1187 = vmul.f32 %v1057, %v1057
      %v1188 = vmul.f32 %v1058, %v1058
      %v1189 = vmul.f32 %v1059, %v1059
      %v1190 = vmul.f32 %v1060, %v1060
      %v1191 = vmul.f32 %v1061, %v1061
      %v1192 = vmul.f32 %v1062, %v1062
      %v1193 = vmul.f32 %v1063, %v1063
      %v1194 = vmul.f32 %v1064, %v1064
      %v1195 = vmul.f32 %v1057, %v1122
      %v1196 = vmul.f32 %v1058, %v1123
      %v1197 = vmul.f32 %v1059, %v1124
      %v1198 = vmul.f32 %v1060, %v1125
      %v1199 = vmul.f32 %v1061, %v1126
      %v1200 = vmul.f32 %v1062, %v1127
      %v1201 = vmul.f32 %v1063, %v1128
      %v1202 = vmul.f32 %v1064, %v1129
      %v1203 = vmul.f32 %v1187, %v1057
      %v1204 = vmul.f32 %v1188, %v1058
      %v1205 = vmul.f32 %v1189, %v1059
      %v1206 = vmul.f32 %v1190, %v1060
      %v1207 = vmul.f32 %v1191, %v1061
      %v1208 = vmul.f32 %v1192, %v1062
      %v1209 = vmul.f32 %v1193, %v1063
      %v1210 = vmul.f32 %v1194, %v1064
      %v1211 = vmul.f32 %v1187, %v1122
      %v1212 = vmul.f32 %v1188, %v1123
      %v1213 = vmul.f32 %v1189, %v1124
      %v1214 = vmul.f32 %v1190, %v1125
      %v1215 = vmul.f32 %v1191, %v1126
      %v1216 = vmul.f32 %v1192, %v1127
      %v1217 = vmul.f32 %v1193, %v1128
      %v1218 = vmul.f32 %v1194, %v1129
      %v1219 = vmul.f32 %v1187, %v1179
      %v1220 = vmul.f32 %v1188, %v1180
      %v1221 = vmul.f32 %v1189, %v1181
      %v1222 = vmul.f32 %v1190, %v1182
      %v1223 = vmul.f32 %v1191, %v1183
      %v1224 = vmul.f32 %v1192, %v1184
      %v1225 = vmul.f32 %v1193, %v1185
      %v1226 = vmul.f32 %v1194, %v1186
      %v1227 = vmul.f32 %v1195, %v1179
      %v1228 = vmul.f32 %v1196, %v1180
      %v1229 = vmul.f32 %v1197, %v1181
      %v1230 = vmul.f32 %v1198, %v1182
      %v1231 = vmul.f32 %v1199, %v1183
      %v1232 = vmul.f32 %v1200, %v1184
      %v1233 = vmul.f32 %v1201, %v1185
      %v1234 = vmul.f32 %v1202, %v1186
      %1243 = vrot.lane.b32.xlu0 %v1187, 3
      %v1244 = vpop.permute.xlu0 %1243
      %1245 = vrot.lane.b32.xlu0 %v1188, 3
      %v1246 = vpop.permute.xlu0 %1245
      %1247 = vrot.lane.b32.xlu0 %v1189, 3
      %v1248 = vpop.permute.xlu0 %1247
      %1249 = vrot.lane.b32.xlu0 %v1190, 3
      %v1250 = vpop.permute.xlu0 %1249
      %1251 = vrot.lane.b32.xlu0 %v1191, 3
      %v1252 = vpop.permute.xlu0 %1251
      %1253 = vrot.lane.b32.xlu0 %v1192, 3
      %v1254 = vpop.permute.xlu0 %1253
      %1255 = vrot.lane.b32.xlu0 %v1193, 3
      %v1256 = vpop.permute.xlu0 %1255
      %1257 = vrot.lane.b32.xlu0 %v1194, 3
      %v1258 = vpop.permute.xlu0 %1257
      %1275 = vrot.lane.b32.xlu0 %v1195, 6
      %v1276 = vpop.permute.xlu0 %1275
      %1277 = vrot.lane.b32.xlu0 %v1196, 6
      %v1278 = vpop.permute.xlu0 %1277
      %1279 = vrot.lane.b32.xlu0 %v1197, 6
      %v1280 = vpop.permute.xlu0 %1279
      %1281 = vrot.lane.b32.xlu0 %v1198, 6
      %v1282 = vpop.permute.xlu0 %1281
      %1283 = vrot.lane.b32.xlu0 %v1199, 6
      %v1284 = vpop.permute.xlu0 %1283
      %1285 = vrot.lane.b32.xlu0 %v1200, 6
      %v1286 = vpop.permute.xlu0 %1285
      %1287 = vrot.lane.b32.xlu0 %v1201, 6
      %v1288 = vpop.permute.xlu0 %1287
      %1289 = vrot.lane.b32.xlu0 %v1202, 6
      %v1290 = vpop.permute.xlu0 %1289
      %1307 = vrot.lane.b32.xlu0 %v1203, 9
      %v1308 = vpop.permute.xlu0 %1307
      %1309 = vrot.lane.b32.xlu0 %v1204, 9
      %v1310 = vpop.permute.xlu0 %1309
      %1311 = vrot.lane.b32.xlu0 %v1205, 9
      %v1312 = vpop.permute.xlu0 %1311
      %1313 = vrot.lane.b32.xlu0 %v1206, 9
      %v1314 = vpop.permute.xlu0 %1313
      %1315 = vrot.lane.b32.xlu0 %v1207, 9
      %v1316 = vpop.permute.xlu0 %1315
      %1317 = vrot.lane.b32.xlu0 %v1208, 9
      %v1318 = vpop.permute.xlu0 %1317
      %1319 = vrot.lane.b32.xlu0 %v1209, 9
      %v1320 = vpop.permute.xlu0 %1319
      %1321 = vrot.lane.b32.xlu0 %v1210, 9
      %v1322 = vpop.permute.xlu0 %1321
      %1339 = vrot.lane.b32.xlu0 %v1211, 12
      %v1340 = vpop.permute.xlu0 %1339
      %1341 = vrot.lane.b32.xlu0 %v1212, 12
      %v1342 = vpop.permute.xlu0 %1341
      %1343 = vrot.lane.b32.xlu0 %v1213, 12
      %v1344 = vpop.permute.xlu0 %1343
      %1345 = vrot.lane.b32.xlu0 %v1214, 12
      %v1346 = vpop.permute.xlu0 %1345
      %1347 = vrot.lane.b32.xlu0 %v1215, 12
      %v1348 = vpop.permute.xlu0 %1347
      %1349 = vrot.lane.b32.xlu0 %v1216, 12
      %v1350 = vpop.permute.xlu0 %1349
      %1351 = vrot.lane.b32.xlu0 %v1217, 12
      %v1352 = vpop.permute.xlu0 %1351
      %1353 = vrot.lane.b32.xlu0 %v1218, 12
      %v1354 = vpop.permute.xlu0 %1353
      %1371 = vrot.lane.b32.xlu0 %v1219, 15
      %v1372 = vpop.permute.xlu0 %1371
      %1373 = vrot.lane.b32.xlu0 %v1220, 15
      %v1374 = vpop.permute.xlu0 %1373
      %1375 = vrot.lane.b32.xlu0 %v1221, 15
      %v1376 = vpop.permute.xlu0 %1375
      %1377 = vrot.lane.b32.xlu0 %v1222, 15
      %v1378 = vpop.permute.xlu0 %1377
      %1379 = vrot.lane.b32.xlu0 %v1223, 15
      %v1380 = vpop.permute.xlu0 %1379
      %1381 = vrot.lane.b32.xlu0 %v1224, 15
      %v1382 = vpop.permute.xlu0 %1381
      %1383 = vrot.lane.b32.xlu0 %v1225, 15
      %v1384 = vpop.permute.xlu0 %1383
      %1385 = vrot.lane.b32.xlu0 %v1226, 15
      %v1386 = vpop.permute.xlu0 %1385
      %1403 = vrot.lane.b32.xlu0 %v1227, 18
      %v1404 = vpop.permute.xlu0 %1403
      %1405 = vrot.lane.b32.xlu0 %v1228, 18
      %v1406 = vpop.permute.xlu0 %1405
      %1407 = vrot.lane.b32.xlu0 %v1229, 18
      %v1408 = vpop.permute.xlu0 %1407
      %1409 = vrot.lane.b32.xlu0 %v1230, 18
      %v1410 = vpop.permute.xlu0 %1409
      %1411 = vrot.lane.b32.xlu0 %v1231, 18
      %v1412 = vpop.permute.xlu0 %1411
      %1413 = vrot.lane.b32.xlu0 %v1232, 18
      %v1414 = vpop.permute.xlu0 %1413
      %1415 = vrot.lane.b32.xlu0 %v1233, 18
      %v1416 = vpop.permute.xlu0 %1415
      %1417 = vrot.lane.b32.xlu0 %v1234, 18
      %v1418 = vpop.permute.xlu0 %1417
      %1427 = vrot.lane.b32.xlu0 %v1057, 21
      %v1428 = vpop.permute.xlu0 %1427
      %1429 = vrot.lane.b32.xlu0 %v1058, 21
      %v1430 = vpop.permute.xlu0 %1429
      %1431 = vrot.lane.b32.xlu0 %v1059, 21
      %v1432 = vpop.permute.xlu0 %1431
      %1433 = vrot.lane.b32.xlu0 %v1060, 21
      %v1434 = vpop.permute.xlu0 %1433
      %1435 = vrot.lane.b32.xlu0 %v1061, 21
      %v1436 = vpop.permute.xlu0 %1435
      %1437 = vrot.lane.b32.xlu0 %v1062, 21
      %v1438 = vpop.permute.xlu0 %1437
      %1439 = vrot.lane.b32.xlu0 %v1063, 21
      %v1440 = vpop.permute.xlu0 %1439
      %1441 = vrot.lane.b32.xlu0 %v1064, 21
      %v1442 = vpop.permute.xlu0 %1441
      %vm1451 = vcmask 23552
      %v1452 = vsel %vm1451, %v1057, %v1244
      %v1453 = vsel %vm1451, %v1058, %v1246
      %v1454 = vsel %vm1451, %v1059, %v1248
      %v1455 = vsel %vm1451, %v1060, %v1250
      %v1456 = vsel %vm1451, %v1061, %v1252
      %v1457 = vsel %vm1451, %v1062, %v1254
      %v1458 = vsel %vm1451, %v1063, %v1256
      %v1459 = vsel %vm1451, %v1064, %v1258
      %vm1460 = vcmask 48128
      %v1461 = vsel %vm1460, %v1452, %v1276
      %v1462 = vsel %vm1460, %v1453, %v1278
      %v1463 = vsel %vm1460, %v1454, %v1280
      %v1464 = vsel %vm1460, %v1455, %v1282
      %v1465 = vsel %vm1460, %v1456, %v1284
      %v1466 = vsel %vm1460, %v1457, %v1286
      %v1467 = vsel %vm1460, %v1458, %v1288
      %v1468 = vsel %vm1460, %v1459, %v1290
      %vm1469 = vcmask 72704
      %v1470 = vsel %vm1469, %v1461, %v1308
      %v1471 = vsel %vm1469, %v1462, %v1310
      %v1472 = vsel %vm1469, %v1463, %v1312
      %v1473 = vsel %vm1469, %v1464, %v1314
      %v1474 = vsel %vm1469, %v1465, %v1316
      %v1475 = vsel %vm1469, %v1466, %v1318
      %v1476 = vsel %vm1469, %v1467, %v1320
      %v1477 = vsel %vm1469, %v1468, %v1322
      %vm1478 = vcmask 97280
      %v1479 = vsel %vm1478, %v1470, %v1340
      %v1480 = vsel %vm1478, %v1471, %v1342
      %v1481 = vsel %vm1478, %v1472, %v1344
      %v1482 = vsel %vm1478, %v1473, %v1346
      %v1483 = vsel %vm1478, %v1474, %v1348
      %v1484 = vsel %vm1478, %v1475, %v1350
      %v1485 = vsel %vm1478, %v1476, %v1352
      %v1486 = vsel %vm1478, %v1477, %v1354
      %vm1487 = vcmask 121856
      %v1488 = vsel %vm1487, %v1479, %v1372
      %v1489 = vsel %vm1487, %v1480, %v1374
      %v1490 = vsel %vm1487, %v1481, %v1376
      %v1491 = vsel %vm1487, %v1482, %v1378
      %v1492 = vsel %vm1487, %v1483, %v1380
      %v1493 = vsel %vm1487, %v1484, %v1382
      %v1494 = vsel %vm1487, %v1485, %v1384
      %v1495 = vsel %vm1487, %v1486, %v1386
      %vm1496 = vcmask 146432
      %v1497 = vsel %vm1496, %v1488, %v1404
      %v1498 = vsel %vm1496, %v1489, %v1406
      %v1499 = vsel %vm1496, %v1490, %v1408
      %v1500 = vsel %vm1496, %v1491, %v1410
      %v1501 = vsel %vm1496, %v1492, %v1412
      %v1502 = vsel %vm1496, %v1493, %v1414
      %v1503 = vsel %vm1496, %v1494, %v1416
      %v1504 = vsel %vm1496, %v1495, %v1418
      %vm1505 = vcmask 171008
      %v1506 = vsel %vm1505, %v1497, %v1428
      %v1507 = vsel %vm1505, %v1498, %v1430
      %v1508 = vsel %vm1505, %v1499, %v1432
      %v1509 = vsel %vm1505, %v1500, %v1434
      %v1510 = vsel %vm1505, %v1501, %v1436
      %v1511 = vsel %vm1505, %v1502, %v1438
      %v1512 = vsel %vm1505, %v1503, %v1440
      %v1513 = vsel %vm1505, %v1504, %v1442
      %v1514 = vpack.c.bf16 %v1507, %v1506
      %v1515 = vpack.c.bf16 %v1509, %v1508
      %v1516 = vpack.c.bf16 %v1511, %v1510
      %v1517 = vpack.c.bf16 %v1513, %v1512
      %v1518 = vld [vmem:[%s7] sm:$0xf]
      %v1519 = vld [vmem:[%s7 + $0x4] sm:$0xf]
      %v1520 = vld [vmem:[%s7 + $0x8] sm:$0xf]
      %v1521 = vpack.c.bf16 %v891, %v890
      %v1522 = vpack.c.bf16 %v893, %v892
      %v1523 = vpack.c.bf16 %v895, %v894
      %v1524 = vpack.c.bf16 %v897, %v896
      %v1525 = vld [vmem:[%s8] sm:$0xf]
      %v1526 = vld [vmem:[%s8 + $0x4] sm:$0xf]
      %v1527 = vld [vmem:[%s8 + $0x8] sm:$0xf]
      %v1528 = vld [vmem:[%s8 + $0xc] sm:$0xf]
      %v1533 = vunpack.c.l.b16 %v1525
      %v1534 = vunpack.c.l.b16 %v1526
      %v1535 = vunpack.c.l.b16 %v1527
      %v1536 = vunpack.c.l.b16 %v1528
      %v1537 = vpack.c.b16 %v1534, %v1533
      %v1538 = vpack.c.b16 %v1536, %v1535
      %v1542 = vsel %vm509, %v1521, 0
      %v1545 = vsel %vm509, %v1522, 0
      %v1548 = vsel %vm509, %v1523, 0
      %v1551 = vsel %vm509, %v1524, 0
      %1553 = vmatprep.subr.bf16.mxu0 0
      %1554 = vmatpush1.bf16.msra.mxu0 %v1537
      %1555 = vmatprep.subr.bf16.mxu0 0
      %1556 = vmatpush1.bf16.msra.mxu0 %v1538
      %1557 = vmatprep.subr.bf16.mxu0 0
      %1558 = vmatpush1.bf16.msra.mxu0 0
      %1559 = vmatprep.subr.bf16.mxu0 0
      %1560 = vmatpush1.bf16.msra.mxu0 0
      %1561 = vmatprep.subr.bf16.mxu0 0
      %1562 = vmatpush1.bf16.msra.mxu0 0
      %1563 = vmatprep.subr.bf16.mxu0 0
      %1564 = vmatpush1.bf16.msra.mxu0 0
      %1565 = vmatprep.subr.bf16.mxu0 0
      %1566 = vmatpush1.bf16.msra.mxu0 0
      %1567 = vmatprep.subr.bf16.mxu0 0
      %1568 = vmatpush1.bf16.msra.mxu0 0
      %1569 = vmatprep.subr.bf16.mxu0 0
      %1570 = vmatpush1.bf16.msra.mxu0 0
      %1571 = vmatprep.subr.bf16.mxu0 0
      %1572 = vmatpush1.bf16.msra.mxu0 0
      %1573 = vmatprep.subr.bf16.mxu0 0
      %1574 = vmatpush1.bf16.msra.mxu0 0
      %1575 = vmatprep.subr.bf16.mxu0 0
      %1576 = vmatpush1.bf16.msra.mxu0 0
      %1577 = vmatprep.subr.bf16.mxu0 0
      %1578 = vmatpush1.bf16.msra.mxu0 0
      %1579 = vmatprep.subr.bf16.mxu0 0
      %1580 = vmatpush1.bf16.msra.mxu0 0
      %1581 = vmatprep.subr.bf16.mxu0 0
      %1582 = vmatpush1.bf16.msra.mxu0 0
      %1583 = vmatprep.subr.bf16.mxu0 0
      %1584 = vmatpush1.bf16.msra.mxu0 0
      %1585 = vmatprep.mubr.bf16.mxu0 0
      %1586 = vmatmul.mubr.bf16.gmra.mrb[0].mxu0 %v1542
      %v1587 = vpop.f32.mrb[0].mxu0
      %v1588 = vadd.f32 0.0, %v1587
      %v1589 = vpop.f32.mrb[0].mxu0
      %v1590 = vpop.f32.mrb[0].mxu0
      %v1591 = vadd.f32 0.0, %v1590
      %v1592 = vpop.f32.mrb[0].mxu0
      %1593 = vmatprep.mubr.bf16.mxu0 0
      %1594 = vmatmul.mubr.bf16.gmra.mrb[0].mxu0 %v1545
      %v1595 = vpop.f32.mrb[0].mxu0
      %v1596 = vadd.f32 0.0, %v1595
      %v1597 = vpop.f32.mrb[0].mxu0
      %v1598 = vpop.f32.mrb[0].mxu0
      %v1599 = vadd.f32 0.0, %v1598
      %v1600 = vpop.f32.mrb[0].mxu0
      %1601 = vmatprep.mubr.bf16.mxu0 0
      %1602 = vmatmul.mubr.bf16.gmra.mrb[0].mxu0 %v1548
      %v1603 = vpop.f32.mrb[0].mxu0
      %v1604 = vadd.f32 0.0, %v1603
      %v1605 = vpop.f32.mrb[0].mxu0
      %v1606 = vpop.f32.mrb[0].mxu0
      %v1607 = vadd.f32 0.0, %v1606
      %v1608 = vpop.f32.mrb[0].mxu0
      %1609 = vmatprep.mubr.bf16.mxu0 0
      %1610 = vmatmul.mubr.bf16.gmra.mrb[0].mxu0 %v1551
      %v1611 = vpop.f32.mrb[0].mxu0
      %v1612 = vadd.f32 0.0, %v1611
      %v1613 = vpop.f32.mrb[0].mxu0
      %v1614 = vpop.f32.mrb[0].mxu0
      %v1615 = vadd.f32 0.0, %v1614
      %v1616 = vpop.f32.mrb[0].mxu0
      %1617 = vdwg.mxu0
      %v1621 = vunpack.c.l.b16 %v1518
      %v1622 = vunpack.c.l.b16 %v1519
      %v1623 = vunpack.c.l.b16 %v1520
      %v1624 = vpack.c.b16 %v1622, %v1621
      %v1625 = vpack.c.b16 %v1623, %v1623
      %vm1627 = vcmask 195584
      %v1629 = vsel %vm1627, %v1514, 0
      %v1632 = vsel %vm1627, %v1515, 0
      %v1635 = vsel %vm1627, %v1516, 0
      %v1638 = vsel %vm1627, %v1517, 0
      %vm1640 = vcmask 1043456
      %v1642 = vsel %vm1640, %v1625, 0
      %1644 = vmatprep.subr.bf16.mxu0 0
      %1645 = vmatpush1.bf16.msra.mxu0 %v1624
      %1646 = vmatprep.subr.bf16.mxu0 0
      %1647 = vmatpush1.bf16.msra.mxu0 %v1642
      %1648 = vmatprep.subr.bf16.mxu0 0
      %1649 = vmatpush1.bf16.msra.mxu0 0
      %1650 = vmatprep.subr.bf16.mxu0 0
      %1651 = vmatpush1.bf16.msra.mxu0 0
      %1652 = vmatprep.subr.bf16.mxu0 0
      %1653 = vmatpush1.bf16.msra.mxu0 0
      %1654 = vmatprep.subr.bf16.mxu0 0
      %1655 = vmatpush1.bf16.msra.mxu0 0
      %1656 = vmatprep.subr.bf16.mxu0 0
      %1657 = vmatpush1.bf16.msra.mxu0 0
      %1658 = vmatprep.subr.bf16.mxu0 0
      %1659 = vmatpush1.bf16.msra.mxu0 0
      %1660 = vmatprep.subr.bf16.mxu0 0
      %1661 = vmatpush1.bf16.msra.mxu0 0
      %1662 = vmatprep.subr.bf16.mxu0 0
      %1663 = vmatpush1.bf16.msra.mxu0 0
      %1664 = vmatprep.subr.bf16.mxu0 0
      %1665 = vmatpush1.bf16.msra.mxu0 0
      %1666 = vmatprep.subr.bf16.mxu0 0
      %1667 = vmatpush1.bf16.msra.mxu0 0
      %1668 = vmatprep.subr.bf16.mxu0 0
      %1669 = vmatpush1.bf16.msra.mxu0 0
      %1670 = vmatprep.subr.bf16.mxu0 0
      %1671 = vmatpush1.bf16.msra.mxu0 0
      %1672 = vmatprep.subr.bf16.mxu0 0
      %1673 = vmatpush1.bf16.msra.mxu0 0
      %1674 = vmatprep.subr.bf16.mxu0 0
      %1675 = vmatpush1.bf16.msra.mxu0 0
      %1676 = vmatprep.mubr.bf16.mxu0 0
      %1677 = vmatmul.mubr.bf16.gmra.mrb[0].mxu0 %v1629
      %v1678 = vpop.f32.mrb[0].mxu0
      %v1679 = vadd.f32 %v1588, %v1678
      %v1680 = vpop.f32.mrb[0].mxu0
      %v1681 = vpop.f32.mrb[0].mxu0
      %v1682 = vadd.f32 %v1591, %v1681
      %v1683 = vpop.f32.mrb[0].mxu0
      %1684 = vmatprep.mubr.bf16.mxu0 0
      %1685 = vmatmul.mubr.bf16.gmra.mrb[0].mxu0 %v1632
      %v1686 = vpop.f32.mrb[0].mxu0
      %v1687 = vadd.f32 %v1596, %v1686
      %v1688 = vpop.f32.mrb[0].mxu0
      %v1689 = vpop.f32.mrb[0].mxu0
      %v1690 = vadd.f32 %v1599, %v1689
      %v1691 = vpop.f32.mrb[0].mxu0
      %1692 = vmatprep.mubr.bf16.mxu0 0
      %1693 = vmatmul.mubr.bf16.gmra.mrb[0].mxu0 %v1635
      %v1694 = vpop.f32.mrb[0].mxu0
      %v1695 = vadd.f32 %v1604, %v1694
      %v1696 = vpop.f32.mrb[0].mxu0
      %v1697 = vpop.f32.mrb[0].mxu0
      %v1698 = vadd.f32 %v1607, %v1697
      %v1699 = vpop.f32.mrb[0].mxu0
      %1700 = vmatprep.mubr.bf16.mxu0 0
      %1701 = vmatmul.mubr.bf16.gmra.mrb[0].mxu0 %v1638
      %v1702 = vpop.f32.mrb[0].mxu0
      %v1703 = vadd.f32 %v1612, %v1702
      %v1704 = vpop.f32.mrb[0].mxu0
      %v1705 = vpop.f32.mrb[0].mxu0
      %v1706 = vadd.f32 %v1615, %v1705
      %v1707 = vpop.f32.mrb[0].mxu0
      %1708 = vdwg.mxu0
      %v1709 = vld [vmem:[%s11] sm:$0x1]
      %v1711 = vlaneseq
      %v1712 = vshrl.u32 %v1711, 7
      %v1713 = vsub.s32 0, %v1712
      %v1714 = vrot.slane %v1709, %v1713
      %v1716 = vadd.f32 %v1679, %v1714
      %v1717 = vadd.f32 %v1682, %v1714
      %v1718 = vadd.f32 %v1687, %v1714
      %v1719 = vadd.f32 %v1690, %v1714
      %v1720 = vadd.f32 %v1695, %v1714
      %v1721 = vadd.f32 %v1698, %v1714
      %v1722 = vadd.f32 %v1703, %v1714
      %v1723 = vadd.f32 %v1706, %v1714
      %v1724 = vmax.f32 %v1716, 0.0
      %v1725 = vmax.f32 %v1717, 0.0
      %v1726 = vmax.f32 %v1718, 0.0
      %v1727 = vmax.f32 %v1719, 0.0
      %v1728 = vmax.f32 %v1720, 0.0
      %v1729 = vmax.f32 %v1721, 0.0
      %v1730 = vmax.f32 %v1722, 0.0
      %v1731 = vmax.f32 %v1723, 0.0
      %v1732 = vpack.c.bf16 %v1725, %v1724
      %v1733 = vpack.c.bf16 %v1727, %v1726
      %v1734 = vpack.c.bf16 %v1729, %v1728
      %v1735 = vpack.c.bf16 %v1731, %v1730
      %v1736 = vld [vmem:[%s9] sm:$0xf]
      %v1737 = vld [vmem:[%s9 + $0x4] sm:$0xf]
      %v1738 = vld [vmem:[%s9 + $0x8] sm:$0xf]
      %v1739 = vld [vmem:[%s9 + $0xc] sm:$0xf]
      %v1740 = vld [vmem:[%s9 + $0x10] sm:$0xf]
      %v1741 = vld [vmem:[%s9 + $0x14] sm:$0xf]
      %v1742 = vld [vmem:[%s9 + $0x18] sm:$0xf]
      %v1743 = vld [vmem:[%s9 + $0x1c] sm:$0xf]
      %v1752 = vunpack.c.l.b16 %v1736
      %v1753 = vunpack.c.l.b16 %v1737
      %v1754 = vunpack.c.l.b16 %v1738
      %v1755 = vunpack.c.l.b16 %v1739
      %v1756 = vunpack.c.l.b16 %v1740
      %v1757 = vunpack.c.l.b16 %v1741
      %v1758 = vunpack.c.l.b16 %v1742
      %v1759 = vunpack.c.l.b16 %v1743
      %v1760 = vpack.c.b16 %v1753, %v1752
      %v1761 = vpack.c.b16 %v1755, %v1754
      %v1762 = vpack.c.b16 %v1757, %v1756
      %v1763 = vpack.c.b16 %v1759, %v1758
      %v1769 = vsel %vm627, %v1732, 0
      %v1772 = vsel %vm627, %v1733, 0
      %v1775 = vsel %vm627, %v1734, 0
      %v1778 = vsel %vm627, %v1735, 0
      %1780 = vmatprep.subr.bf16.mxu0 0
      %1781 = vmatpush1.bf16.msra.mxu0 %v1760
      %1782 = vmatprep.subr.bf16.mxu0 0
      %1783 = vmatpush1.bf16.msra.mxu0 %v1761
      %1784 = vmatprep.subr.bf16.mxu0 0
      %1785 = vmatpush1.bf16.msra.mxu0 %v1762
      %1786 = vmatprep.subr.bf16.mxu0 0
      %1787 = vmatpush1.bf16.msra.mxu0 %v1763
      %1788 = vmatprep.subr.bf16.mxu0 0
      %1789 = vmatpush1.bf16.msra.mxu0 0
      %1790 = vmatprep.subr.bf16.mxu0 0
      %1791 = vmatpush1.bf16.msra.mxu0 0
      %1792 = vmatprep.subr.bf16.mxu0 0
      %1793 = vmatpush1.bf16.msra.mxu0 0
      %1794 = vmatprep.subr.bf16.mxu0 0
      %1795 = vmatpush1.bf16.msra.mxu0 0
      %1796 = vmatprep.subr.bf16.mxu0 0
      %1797 = vmatpush1.bf16.msra.mxu0 0
      %1798 = vmatprep.subr.bf16.mxu0 0
      %1799 = vmatpush1.bf16.msra.mxu0 0
      %1800 = vmatprep.subr.bf16.mxu0 0
      %1801 = vmatpush1.bf16.msra.mxu0 0
      %1802 = vmatprep.subr.bf16.mxu0 0
      %1803 = vmatpush1.bf16.msra.mxu0 0
      %1804 = vmatprep.subr.bf16.mxu0 0
      %1805 = vmatpush1.bf16.msra.mxu0 0
      %1806 = vmatprep.subr.bf16.mxu0 0
      %1807 = vmatpush1.bf16.msra.mxu0 0
      %1808 = vmatprep.subr.bf16.mxu0 0
      %1809 = vmatpush1.bf16.msra.mxu0 0
      %1810 = vmatprep.subr.bf16.mxu0 0
      %1811 = vmatpush1.bf16.msra.mxu0 0
      %1812 = vmatprep.mubr.bf16.mxu0 0
      %1813 = vmatmul.mubr.bf16.gmra.mrb[0].mxu0 %v1769
      %v1814 = vpop.f32.mrb[0].mxu0
      %v1815 = vadd.f32 0.0, %v1814
      %v1816 = vpop.f32.mrb[0].mxu0
      %v1817 = vpop.f32.mrb[0].mxu0
      %v1818 = vadd.f32 0.0, %v1817
      %v1819 = vpop.f32.mrb[0].mxu0
      %1820 = vmatprep.mubr.bf16.mxu0 0
      %1821 = vmatmul.mubr.bf16.gmra.mrb[0].mxu0 %v1772
      %v1822 = vpop.f32.mrb[0].mxu0
      %v1823 = vadd.f32 0.0, %v1822
      %v1824 = vpop.f32.mrb[0].mxu0
      %v1825 = vpop.f32.mrb[0].mxu0
      %v1826 = vadd.f32 0.0, %v1825
      %v1827 = vpop.f32.mrb[0].mxu0
      %1828 = vmatprep.mubr.bf16.mxu0 0
      %1829 = vmatmul.mubr.bf16.gmra.mrb[0].mxu0 %v1775
      %v1830 = vpop.f32.mrb[0].mxu0
      %v1831 = vadd.f32 0.0, %v1830
      %v1832 = vpop.f32.mrb[0].mxu0
      %v1833 = vpop.f32.mrb[0].mxu0
      %v1834 = vadd.f32 0.0, %v1833
      %v1835 = vpop.f32.mrb[0].mxu0
      %1836 = vmatprep.mubr.bf16.mxu0 0
      %1837 = vmatmul.mubr.bf16.gmra.mrb[0].mxu0 %v1778
      %v1838 = vpop.f32.mrb[0].mxu0
      %v1839 = vadd.f32 0.0, %v1838
      %v1840 = vpop.f32.mrb[0].mxu0
      %v1841 = vpop.f32.mrb[0].mxu0
      %v1842 = vadd.f32 0.0, %v1841
      %v1843 = vpop.f32.mrb[0].mxu0
      %1844 = vdwg.mxu0
      %v1845 = vmax.f32 %v1815, 0.0
      %v1846 = vmax.f32 %v1818, 0.0
      %v1847 = vmax.f32 %v1823, 0.0
      %v1848 = vmax.f32 %v1826, 0.0
      %v1849 = vmax.f32 %v1831, 0.0
      %v1850 = vmax.f32 %v1834, 0.0
      %v1851 = vmax.f32 %v1839, 0.0
      %v1852 = vmax.f32 %v1842, 0.0
      %v1853 = vpack.c.bf16 %v1846, %v1845
      %v1854 = vpack.c.bf16 %v1848, %v1847
      %v1855 = vpack.c.bf16 %v1850, %v1849
      %v1856 = vpack.c.bf16 %v1852, %v1851
      %v1857 = vld [vmem:[%s10] sm:$0xf]
      %v1858 = vld [vmem:[%s10 + $0x4] sm:$0xf]
      %v1859 = vld [vmem:[%s10 + $0x8] sm:$0xf]
      %v1860 = vld [vmem:[%s10 + $0xc] sm:$0xf]
      %v1861 = vld [vmem:[%s10 + $0x10] sm:$0xf]
      %v1862 = vld [vmem:[%s10 + $0x14] sm:$0xf]
      %v1863 = vld [vmem:[%s10 + $0x18] sm:$0xf]
      %v1864 = vld [vmem:[%s10 + $0x1c] sm:$0xf]
      %v1873 = vunpack.c.l.b16 %v1857
      %v1874 = vunpack.c.l.b16 %v1858
      %v1875 = vunpack.c.l.b16 %v1859
      %v1876 = vunpack.c.l.b16 %v1860
      %v1877 = vunpack.c.l.b16 %v1861
      %v1878 = vunpack.c.l.b16 %v1862
      %v1879 = vunpack.c.l.b16 %v1863
      %v1880 = vunpack.c.l.b16 %v1864
      %v1881 = vpack.c.b16 %v1874, %v1873
      %v1882 = vpack.c.b16 %v1876, %v1875
      %v1883 = vpack.c.b16 %v1878, %v1877
      %v1884 = vpack.c.b16 %v1880, %v1879
      %v1890 = vsel %vm627, %v1853, 0
      %v1893 = vsel %vm627, %v1854, 0
      %v1896 = vsel %vm627, %v1855, 0
      %v1899 = vsel %vm627, %v1856, 0
      %1901 = vmatprep.subr.bf16.mxu0 0
      %1902 = vmatpush1.bf16.msra.mxu0 %v1881
      %1903 = vmatprep.subr.bf16.mxu0 0
      %1904 = vmatpush1.bf16.msra.mxu0 %v1882
      %1905 = vmatprep.subr.bf16.mxu0 0
      %1906 = vmatpush1.bf16.msra.mxu0 %v1883
      %1907 = vmatprep.subr.bf16.mxu0 0
      %1908 = vmatpush1.bf16.msra.mxu0 %v1884
      %1909 = vmatprep.subr.bf16.mxu0 0
      %1910 = vmatpush1.bf16.msra.mxu0 0
      %1911 = vmatprep.subr.bf16.mxu0 0
      %1912 = vmatpush1.bf16.msra.mxu0 0
      %1913 = vmatprep.subr.bf16.mxu0 0
      %1914 = vmatpush1.bf16.msra.mxu0 0
      %1915 = vmatprep.subr.bf16.mxu0 0
      %1916 = vmatpush1.bf16.msra.mxu0 0
      %1917 = vmatprep.subr.bf16.mxu0 0
      %1918 = vmatpush1.bf16.msra.mxu0 0
      %1919 = vmatprep.subr.bf16.mxu0 0
      %1920 = vmatpush1.bf16.msra.mxu0 0
      %1921 = vmatprep.subr.bf16.mxu0 0
      %1922 = vmatpush1.bf16.msra.mxu0 0
      %1923 = vmatprep.subr.bf16.mxu0 0
      %1924 = vmatpush1.bf16.msra.mxu0 0
      %1925 = vmatprep.subr.bf16.mxu0 0
      %1926 = vmatpush1.bf16.msra.mxu0 0
      %1927 = vmatprep.subr.bf16.mxu0 0
      %1928 = vmatpush1.bf16.msra.mxu0 0
      %1929 = vmatprep.subr.bf16.mxu0 0
      %1930 = vmatpush1.bf16.msra.mxu0 0
      %1931 = vmatprep.subr.bf16.mxu0 0
      %1932 = vmatpush1.bf16.msra.mxu0 0
      %1933 = vmatprep.mubr.bf16.mxu0 0
      %1934 = vmatmul.mubr.bf16.gmra.mrb[0].mxu0 %v1890
      %v1935 = vpop.f32.mrb[0].mxu0
      %v1936 = vadd.f32 0.0, %v1935
      %v1937 = vpop.f32.mrb[0].mxu0
      %v1938 = vpop.f32.mrb[0].mxu0
      %v1939 = vadd.f32 0.0, %v1938
      %v1940 = vpop.f32.mrb[0].mxu0
      %1941 = vmatprep.mubr.bf16.mxu0 0
      %1942 = vmatmul.mubr.bf16.gmra.mrb[0].mxu0 %v1893
      %v1943 = vpop.f32.mrb[0].mxu0
      %v1944 = vadd.f32 0.0, %v1943
      %v1945 = vpop.f32.mrb[0].mxu0
      %v1946 = vpop.f32.mrb[0].mxu0
      %v1947 = vadd.f32 0.0, %v1946
      %v1948 = vpop.f32.mrb[0].mxu0
      %1949 = vmatprep.mubr.bf16.mxu0 0
      %1950 = vmatmul.mubr.bf16.gmra.mrb[0].mxu0 %v1896
      %v1951 = vpop.f32.mrb[0].mxu0
      %v1952 = vadd.f32 0.0, %v1951
      %v1953 = vpop.f32.mrb[0].mxu0
      %v1954 = vpop.f32.mrb[0].mxu0
      %v1955 = vadd.f32 0.0, %v1954
      %v1956 = vpop.f32.mrb[0].mxu0
      %1957 = vmatprep.mubr.bf16.mxu0 0
      %1958 = vmatmul.mubr.bf16.gmra.mrb[0].mxu0 %v1899
      %v1959 = vpop.f32.mrb[0].mxu0
      %v1960 = vadd.f32 0.0, %v1959
      %v1961 = vpop.f32.mrb[0].mxu0
      %v1962 = vpop.f32.mrb[0].mxu0
      %v1963 = vadd.f32 0.0, %v1962
      %v1964 = vpop.f32.mrb[0].mxu0
      %1965 = vdwg.mxu0
      %v1966 = vxor.u32 %v1936, 2147483648
      %v1967 = vxor.u32 %v1939, 2147483648
      %v1968 = vxor.u32 %v1944, 2147483648
      %v1969 = vxor.u32 %v1947, 2147483648
      %v1970 = vxor.u32 %v1952, 2147483648
      %v1971 = vxor.u32 %v1955, 2147483648
      %v1972 = vxor.u32 %v1960, 2147483648
      %v1973 = vxor.u32 %v1963, 2147483648
      %v1974 = vmul.f32 %v1966, 1.442695
      %v1975 = vpow.pop %v1974
      %v1976 = vmul.f32 %v1967, 1.442695
      %v1977 = vpow.pop %v1976
      %v1978 = vmul.f32 %v1968, 1.442695
      %v1979 = vpow.pop %v1978
      %v1980 = vmul.f32 %v1969, 1.442695
      %v1981 = vpow.pop %v1980
      %v1982 = vmul.f32 %v1970, 1.442695
      %v1983 = vpow.pop %v1982
      %v1984 = vmul.f32 %v1971, 1.442695
      %v1985 = vpow.pop %v1984
      %v1986 = vmul.f32 %v1972, 1.442695
      %v1987 = vpow.pop %v1986
      %v1988 = vmul.f32 %v1973, 1.442695
      %v1989 = vpow.pop %v1988
      %v1990 = vadd.f32 %v1975, 1.0
      %v1991 = vadd.f32 %v1977, 1.0
      %v1992 = vadd.f32 %v1979, 1.0
      %v1993 = vadd.f32 %v1981, 1.0
      %v1994 = vadd.f32 %v1983, 1.0
      %v1995 = vadd.f32 %v1985, 1.0
      %v1996 = vadd.f32 %v1987, 1.0
      %v1997 = vadd.f32 %v1989, 1.0
      %v1998 = vrcp.pop %v1990
      %v1999 = vmul.f32 1.0, %v1998
      %v2000 = vrcp.pop %v1991
      %v2001 = vmul.f32 1.0, %v2000
      %v2002 = vrcp.pop %v1992
      %v2003 = vmul.f32 1.0, %v2002
      %v2004 = vrcp.pop %v1993
      %v2005 = vmul.f32 1.0, %v2004
      %v2006 = vrcp.pop %v1994
      %v2007 = vmul.f32 1.0, %v2006
      %v2008 = vrcp.pop %v1995
      %v2009 = vmul.f32 1.0, %v2008
      %v2010 = vrcp.pop %v1996
      %v2011 = vmul.f32 1.0, %v2010
      %v2012 = vrcp.pop %v1997
      %v2013 = vmul.f32 1.0, %v2012
      %vm2014 = vcmask 64512
      %2015 = vst.msk [vmem:[%s437] sm:$0xff] %vm2014, %v1999
      %2016 = vst.msk [vmem:[%s437 + $0x8] sm:$0xff] %vm2014, %v2001
      %2017 = vst.msk [vmem:[%s437 + $0x10] sm:$0xff] %vm2014, %v2003
      %2018 = vst.msk [vmem:[%s437 + $0x18] sm:$0xff] %vm2014, %v2005
      %2019 = vst.msk [vmem:[%s437 + $0x20] sm:$0xff] %vm2014, %v2007
      %2020 = vst.msk [vmem:[%s437 + $0x28] sm:$0xff] %vm2014, %v2009
      %2021 = vst.msk [vmem:[%s437 + $0x30] sm:$0xff] %vm2014, %v2011
      %2022 = vst.msk [vmem:[%s437 + $0x38] sm:$0xff] %vm2014, %v2013
      %s2023 = smul.u32 8, %s23
      %p2024 = scmp.lt.s32.totalorder %s2023, 31
      %s2025 = scalar_select %p2024, %s2023, 31
      %s2026 = smul.addr %s2025, 8
      %s2027 = scalar_lea.vmem %s12, %s2026
      // Predicated region
      $region69: #{color_model_forward.1} parent=67 // pred_check
        %p2028 = pneg %p303
      $region70: #{color_model_forward.1} parent=67 // pred_check_branch
        %2030 = sbr.rel (%p2028) target = $region72
      $region71: #{color_model_forward.1} parent=67 // pred_region
        %s2031 = smul.u32 8, %s23
      $region72: #{color_model_forward.1} parent=67 // pred_fallthru
        _
    $region68: #{color_model_forward.1} parent=5 // pred_fallthru
      _
    %p2032 = scmp.le.s32.totalorder 2, %s18
    // Predicated region
    $region73: #{color_model_forward.1} parent=5 // pred_check
      %p2033 = pneg %p2032
    $region74: #{color_model_forward.1} parent=5 // pred_check_branch
      %2035 = sbr.rel (%p2033) target = $region76
    $region75: #{color_model_forward.1} parent=5 // pred_region
      %s2036 = ssub.s32 %s18, 2
      // Predicated region
      $region77: #{color_model_forward.1} parent=75 // pred_check
        %p2037 = pneg %p309
      $region78: #{color_model_forward.1} parent=75 // pred_check_branch
        %2039 = sbr.rel (%p2037) target = $region80
      $region79: #{color_model_forward.1} parent=75 // pred_region
        %s2040 = smul.u32 8, %s24
        %p2041 = scmp.lt.s32.totalorder %s2040, 31
        %s2042 = scalar_select %p2041, %s2040, 31
        %s2043 = smul.addr %s2042, 8
        %s2044 = scalar_lea.vmem %s12, %s2043
      $region80: #{color_model_forward.1} parent=75 // pred_fallthru
        _
    $region76: #{color_model_forward.1} parent=5 // pred_fallthru
      _
  $region6: #{color_model_forward.1} parent=0 // loop_footer
    %s22 = sadd.s32 1, %s18
  $region7: #{color_model_forward.1} parent=0 // loop_footer_branch
    %17 = sbr.rel target = $region3
  $region8: #{color_model_forward.1} parent=0 // loop_exit
    _

</llo_original>
